<compile_context>
chip_gen: v6e
topology: v6e:2x2x1
jax: 0.10.0
libtpu: 0.0.40
codegen_flags: <defaults>
</compile_context>

<pallas_src>
import jax
import jax.numpy as jnp
from jax.experimental import pallas as pl
from jax.experimental.pallas import tpu as pltpu

F32 = jnp.float32
BF16 = jnp.bfloat16
EPS = 1e-5
TILE_P = 512          # spatial rows per grid step (multiple of 8); written once per tile


def _round_up(n, m):
    return (n + m - 1) // m * m


# --------------------------------------------------------------------------- #
# Fused kernel: extractor (conv + ReLU + GAP) with the head as an epilogue      #
# --------------------------------------------------------------------------- #
def _make_fused_kernel(H, W, K, n_pad):
    inv_hw = 1.0 / float(H * W)

    def kernel(x_ref, cw_ref, wlc_ref, watt_ref, w3_ref, vec_ref,
               feat_ref, xfeat_ref, acc_ref):
        t = pl.program_id(1)
        conv_b = vec_ref[0]                                       # (1, K) f32

        @pl.when(t == 0)
        def _init():
            acc_ref[...] = jnp.zeros_like(acc_ref)

        # ---- conv tile: ONE bf16 MXU matmul, contraction dim = 9*C ----
        a = jnp.dot(x_ref[0], cw_ref[...],                        # (tp,9C)x(9C,K)
                    preferred_element_type=jnp.float32)
        a = jnp.maximum(a + conv_b, 0.0)                          # bias + ReLU (f32)
        acc_ref[...] += jnp.sum(a, axis=0, keepdims=True)         # running GAP sum

        # ---- head epilogue: only on the last spatial tile of this image ----
        @pl.when(t == pl.num_programs(1) - 1)
        def _head():
            acc = acc_ref[...]
            if n_pad:   # zero-padded rows each contributed exactly ReLU(bias)
                acc = acc - float(n_pad) * jnp.maximum(conv_b, 0.0)
            x_feat = acc * inv_hw                                 # global avg pool
            xfeat_ref[0] = x_feat                                 # (1, K)

            b_lin, b_cnn, b_att = vec_ref[1], vec_ref[2], vec_ref[3]
            b3, scale3, shift3 = vec_ref[4], vec_ref[5], vec_ref[6]
            alpha3, w4_eff, c4, alpha4 = (vec_ref[7], vec_ref[8],
                                          vec_ref[9], vec_ref[10])

            # Linear(128->125) and onecnn (banded) fused into one (K, 2K) matmul
            lc = jnp.dot(x_feat.astype(BF16), wlc_ref[...],
                         preferred_element_type=jnp.float32)      # (1, 2K)
            x_linear = lc[:, 0:K] + b_lin
            x_cnn = lc[:, K:2 * K] + b_cnn
            gate = jax.nn.sigmoid(
                jnp.dot(x_linear.astype(BF16), watt_ref[...],
                        preferred_element_type=jnp.float32) + b_att)
            x_atten = x_cnn * gate                                # c_att
            cat = jnp.concatenate([x_linear, x_cnn, x_atten],
                                  axis=1).astype(BF16)            # (1, 3K)
            f = jnp.dot(cat, w3_ref[...],
                        preferred_element_type=jnp.float32) + b3  # fc3
            f = f * scale3 + shift3                               # bn3 (inference)
            f = jnp.maximum(f, 0.0) + alpha3 * jnp.minimum(f, 0.0)       # PReLU3
            y = jnp.sum(f * w4_eff + c4, axis=1, keepdims=True)   # fc4 + bn4 folded
            y = jnp.maximum(y, 0.0) + alpha4 * jnp.minimum(y, 0.0)       # PReLU4
            feat_ref[0] = jnp.broadcast_to(y, (1, K))             # lane-dense store

    return kernel


def _derive_vmem_limit(tile_p, c9, K):
    """Double-buffered block bytes (lane/sublane padded) + scratch, with headroom."""
    lp = lambda n: _round_up(n, 128)
    x_blk = tile_p * lp(c9) * 2                       # bf16 image tile
    cw = _round_up(c9, 16) * lp(K) * 2                # merged conv taps (bf16)
    wlc = K * lp(2 * K) * 2                           # fused Linear|onecnn (bf16)
    watt = K * lp(K) * 2                              # attention gate (bf16)
    w3 = 3 * K * lp(K) * 2                            # fc3 (bf16)
    vecs = 16 * 8 * lp(K) * 4                         # packed f32 vectors
    outs = 2 * 8 * lp(K) * 4                          # two (1,1,K) outputs
    need = 2 * (x_blk + cw + wlc + watt + w3 + vecs + outs) + 8 * lp(K) * 4
    return int(min(48 << 20, max(8 << 20, 2 * need)))  # keep under ~48 MiB (v7x)


def extratcter_map_forward(x, params):
    """x: (B, C, H, W) float32 NCHW -> (feature (B, 1), x_feature (B, 128))."""
    B, C, H, W = x.shape
    K = params["w3_p"].shape[1]
    C9 = 9 * C
    P = H * W
    tile_p = min(TILE_P, _round_up(P, 8))
    P_pad = _round_up(P, tile_p)
    T = P_pad // tile_p
    n_pad = P_pad - P

    # host im2col: channel-minor (B, P, 9*C) bf16 operand.  Same VMEM footprint as
    # the raw (P, C) block (both lane-pad to 128); ~9x image HBM bytes is tiny at
    # C=4 and buys a single contraction-36 matmul per tile.
    xp = jnp.pad(jnp.transpose(x, (0, 2, 3, 1)), ((0, 0), (1, 1), (1, 1), (0, 0)))
    taps = [xp[:, di:di + H, dj:dj + W, :] for di in range(3) for dj in range(3)]
    x_taps = jnp.concatenate(taps, axis=-1).reshape(B, P, C9)
    x_taps = jnp.pad(x_taps, ((0, 0), (0, n_pad), (0, 0))).astype(BF16)

    kernel = _make_fused_kernel(H, W, K, n_pad)
    feat3, xfeat3 = pl.pallas_call(
        kernel,
        out_shape=(jax.ShapeDtypeStruct((B, 1, K), F32),
                   jax.ShapeDtypeStruct((B, 1, K), F32)),
        grid=(B, T),
        in_specs=[
            # image tile; pipeline_mode=pl.Buffered(3) is an option on v5e if the
            # xprof trace shows exposed input DMA.
            pl.BlockSpec((1, tile_p, C9), lambda b, t: (b, t, 0)),
            pl.BlockSpec((C9, K), lambda b, t: (0, 0)),           # merged conv taps
            pl.BlockSpec((K, 2 * K), lambda b, t: (0, 0)),        # w_lin | w_cnn
            pl.BlockSpec((K, K), lambda b, t: (0, 0)),            # w_att (padded)
            pl.BlockSpec((3 * K, K), lambda b, t: (0, 0)),        # fc3 (padded)
            pl.BlockSpec((16, 1, K), lambda b, t: (0, 0, 0)),     # packed vectors
        ],
        out_specs=[
            pl.BlockSpec((1, 1, K), lambda b, t: (b, 0, 0)),
            pl.BlockSpec((1, 1, K), lambda b, t: (b, 0, 0)),
        ],
        scratch_shapes=[pltpu.VMEM((1, K), jnp.float32)],         # GAP accumulator
        compiler_params=pltpu.CompilerParams(
            dimension_semantics=("parallel", "arbitrary"),        # batch uses both
            vmem_limit_bytes=_derive_vmem_limit(tile_p, C9, K)),  # v7x TCs when B>1
    )(x_taps, params["cw_packed"], params["w_lc"], params["w_att_p"],
      params["w3_p"], params["vecs"])

    feature = feat3[:, 0, 0:1]      # every lane carries the same scalar
    x_feature = xfeat3[:, 0, :]
    return feature, x_feature


# --------------------------------------------------------------------------- #
# Parameter packing (done once, outside the jitted forward)                    #
# --------------------------------------------------------------------------- #
def _pack_kernel_params(p):
    K = p["conv_w"].shape[0]
    C = p["conv_w"].shape[1]
    s = p["scalars"]

    # merged 3x3 conv taps: (9*C, K) bf16, tap-major / channel-minor row order
    cw_packed = jnp.transpose(p["conv_w"], (2, 3, 1, 0)).reshape(9 * C, K).astype(BF16)

    # Linear(128 -> 125) padded to 128, fused with the onecnn banded matrix
    w_lin_p = jnp.pad(p["w_lin"], ((0, 0), (0, K - 125)))
    b_lin_p = jnp.pad(p["b_lin"], ((0, 0), (0, K - 125)))
    idx = jnp.arange(125)
    w_cnn = jnp.zeros((K, K), F32)
    for k in range(4):                       # Conv1d(1,1,k=4) as a banded matmul
        w_cnn = w_cnn.at[idx + k, idx].set(s[k])
    b_cnn_p = jnp.where(jnp.arange(K) < 125, s[4], 0.0).reshape(1, K)
    w_lc = jnp.concatenate([w_lin_p, w_cnn], axis=1).astype(BF16)     # (K, 2K)

    # c_att gate Linear(125 -> 125): pad to (128,128); pad rows/cols are zero
    w_att_p = jnp.pad(p["w_att"], ((0, K - 125), (0, K - 125))).astype(BF16)
    b_att_p = jnp.pad(p["b_att"], ((0, 0), (0, K - 125)))

    # fc3(375 -> 128) as one (384,128) matmul; zero rows at each segment's pad lanes
    w3_p = jnp.zeros((3 * K, K), F32)
    w3_p = w3_p.at[0:125].set(p["w3_full"][0:125])
    w3_p = w3_p.at[K:K + 125].set(p["w3_full"][125:250])
    w3_p = w3_p.at[2 * K:2 * K + 125].set(p["w3_full"][250:375])
    w3_p = w3_p.astype(BF16)

    # fc4 + bn4 folded:  y = sum(f * (w4*scale4)) + (b4*scale4 + shift4)
    w4_eff = p["w4"] * s[7]
    c4 = (s[6] * s[7] + s[8]) / float(K)     # spread the additive term over lanes

    vecs = jnp.zeros((16, K), F32)
    vecs = vecs.at[0].set(p["conv_b"])
    vecs = vecs.at[1].set(b_lin_p[0])
    vecs = vecs.at[2].set(b_cnn_p[0])
    vecs = vecs.at[3].set(b_att_p[0])
    vecs = vecs.at[4].set(p["b3"][0])
    vecs = vecs.at[5].set(p["scale3"][0])
    vecs = vecs.at[6].set(p["shift3"][0])
    vecs = vecs.at[7].set(s[5])              # PReLU3 alpha (broadcast)
    vecs = vecs.at[8].set(w4_eff[0])
    vecs = vecs.at[9].set(c4)                # folded fc4 bias + bn4 shift
    vecs = vecs.at[10].set(s[9])             # PReLU4 alpha (broadcast)

    return dict(cw_packed=cw_packed, w_lc=w_lc, w_att_p=w_att_p, w3_p=w3_p,
                vecs=vecs.reshape(16, 1, K))


# --------------------------------------------------------------------------- #
# Deterministic synthetic parameters                                           #
# --------------------------------------------------------------------------- #
def init_params(key, C=4, D=128):
    ks = jax.random.split(key, 24)

    def u(k, shape, scale):
        return jax.random.uniform(k, shape, F32, -1.0, 1.0) * scale

    conv_w = u(ks[0], (D, C, 3, 3), 0.2)
    conv_b = u(ks[1], (D,), 0.1)

    w_lin = u(ks[2], (D, 125), 0.1)
    b_lin = u(ks[3], (1, 125), 0.1)

    w1d = u(ks[4], (4,), 0.3)
    b1d = u(ks[5], (), 0.1)

    w_att = u(ks[6], (125, 125), 0.1)
    b_att = u(ks[7], (1, 125), 0.1)

    w3 = u(ks[8], (375, 128), 0.05)            # fc3 weight, (in, out) orientation
    b3 = u(ks[9], (1, 128), 0.05)
    gamma3 = 1.0 + u(ks[10], (1, 128), 0.1)
    beta3 = u(ks[11], (1, 128), 0.1)
    mean3 = u(ks[12], (1, 128), 0.1)
    var3 = 1.0 + jnp.abs(u(ks[13], (1, 128), 0.1))
    scale3 = gamma3 / jnp.sqrt(var3 + EPS)
    shift3 = beta3 - mean3 * scale3
    alpha3 = jnp.float32(0.25)                 # PReLU default init

    w4 = u(ks[14], (1, 128), 0.2)              # fc4 weight as a lane-dense row
    b4 = u(ks[15], (), 0.1)
    gamma4 = 1.0 + u(ks[16], (), 0.1)
    beta4 = u(ks[17], (), 0.1)
    mean4 = u(ks[18], (), 0.1)
    var4 = 1.0 + jnp.abs(u(ks[19], (), 0.1))
    scale4 = gamma4 / jnp.sqrt(var4 + EPS)
    shift4 = beta4 - mean4 * scale4
    alpha4 = jnp.float32(0.25)

    scalars = jnp.zeros((16,), F32)
    scalars = scalars.at[0:4].set(w1d)
    scalars = scalars.at[4].set(b1d)
    scalars = scalars.at[5].set(alpha3)
    scalars = scalars.at[6].set(b4)
    scalars = scalars.at[7].set(scale4)
    scalars = scalars.at[8].set(shift4)
    scalars = scalars.at[9].set(alpha4)

    p = dict(conv_w=conv_w, conv_b=conv_b,
             w_lin=w_lin, b_lin=b_lin,
             w_att=w_att, b_att=b_att,
             w3_full=w3, b3=b3, scale3=scale3, shift3=shift3,
             w4=w4, scalars=scalars)
    p.update(_pack_kernel_params(p))
    return p


# --------------------------------------------------------------------------- #
# Pure-JAX reference (same math, XLA ops) for a sanity check                   #
# --------------------------------------------------------------------------- #
def reference_forward(x, p):
    hi = jax.lax.Precision.HIGHEST
    out = jax.lax.conv_general_dilated(
        x, p["conv_w"], (1, 1), "SAME",
        dimension_numbers=("NCHW", "OIHW", "NCHW"), precision=hi)
    out = jax.nn.relu(out + p["conv_b"][None, :, None, None])
    x_feature = jnp.mean(out, axis=(2, 3))
    x_linear = jnp.dot(x_feature, p["w_lin"], precision=hi) + p["b_lin"]
    s = p["scalars"]
    x_cnn = sum(s[k] * x_feature[:, k:k + 125] for k in range(4)) + s[4]
    gate = jax.nn.sigmoid(jnp.dot(x_linear, p["w_att"], precision=hi) + p["b_att"])
    x_atten = x_cnn * gate
    feat = jnp.concatenate([x_linear, x_cnn, x_atten], axis=1)
    f = jnp.dot(feat, p["w3_full"], precision=hi) + p["b3"]
    f = f * p["scale3"] + p["shift3"]
    f = jnp.maximum(f, 0.0) + s[5] * jnp.minimum(f, 0.0)
    y = jnp.dot(f, p["w4"].T, precision=hi) + s[6]
    y = y * s[7] + s[8]
    y = jnp.maximum(y, 0.0) + s[9] * jnp.minimum(y, 0.0)
    return y, x_feature


if __name__ == "__main__":
    key = jax.random.PRNGKey(0)
    k_x, k_p = jax.random.split(key)

    B, C, H, W = 2, 4, 16, 16
    x = jax.random.normal(k_x, (B, C, H, W), F32)
    params = init_params(k_p, C=C, D=128)

    fwd = jax.jit(extratcter_map_forward)
    feature, x_feature = fwd(x, params)
    jax.block_until_ready((feature, x_feature))

    assert feature.shape == (B, 1) and x_feature.shape == (B, 128)

    ref_feature, ref_x_feature = reference_forward(x, params)
    # conv operands are bf16 (MXU path) vs f32 HIGHEST reference
    assert jnp.allclose(x_feature, ref_x_feature, atol=1e-2, rtol=1e-2)
    # head weights/activations also ride the bf16 MXU path -> slightly looser bound
    assert jnp.allclose(feature, ref_feature, atol=2e-2, rtol=2e-2)

    print("KERNEL_OK")
</pallas_src>

<mosaic_0001>
module attributes {stable_mosaic.version = 11 : i64} {
  func.func @kernel(%arg0: i32, %arg1: i32, %arg2: memref<1x256x36xbf16, #tpu.memory_space<vmem>>, %arg3: memref<36x128xbf16, #tpu.memory_space<vmem>>, %arg4: memref<128x256xbf16, #tpu.memory_space<vmem>>, %arg5: memref<128x128xbf16, #tpu.memory_space<vmem>>, %arg6: memref<384x128xbf16, #tpu.memory_space<vmem>>, %arg7: memref<16x1x128xf32, #tpu.memory_space<vmem>>, %arg8: memref<1x1x128xf32, #tpu.memory_space<vmem>>, %arg9: memref<1x1x128xf32, #tpu.memory_space<vmem>>, %arg10: memref<1x128xf32, #tpu.memory_space<vmem>>) attributes {dimension_semantics = [#tpu.dimension_semantics<parallel>, #tpu.dimension_semantics<arbitrary>], iteration_bounds = array<i64: 2, 1>, scalar_prefetch = 0 : i64, scratch_operands = 1 : i64, tpu.core_type = #tpu.core_type<tc>, window_params = [{transform_indices = @transform_0, window_bounds = array<i64: 1, 256, 36>}, {pipeline_mode = #tpu.pipeline_mode<synchronous>, transform_indices = @transform_1, window_bounds = array<i64: 36, 128>}, {pipeline_mode = #tpu.pipeline_mode<synchronous>, transform_indices = @transform_2, window_bounds = array<i64: 128, 256>}, {pipeline_mode = #tpu.pipeline_mode<synchronous>, transform_indices = @transform_3, window_bounds = array<i64: 128, 128>}, {pipeline_mode = #tpu.pipeline_mode<synchronous>, transform_indices = @transform_4, window_bounds = array<i64: 384, 128>}, {pipeline_mode = #tpu.pipeline_mode<synchronous>, transform_indices = @transform_5, window_bounds = array<i64: 16, 1, 128>}, {transform_indices = @transform_6, window_bounds = array<i64: 1, 1, 128>}, {transform_indices = @transform_7, window_bounds = array<i64: 1, 1, 128>}]} {
    %c0 = arith.constant 0 : index
    %c0_0 = arith.constant 0 : index
    %c0_1 = arith.constant 0 : index
    %0 = vector.load %arg7[%c0, %c0_0, %c0_1] : memref<16x1x128xf32, #tpu.memory_space<vmem>>, vector<1x1x128xf32>
    %1 = vector.shape_cast %0 : vector<1x1x128xf32> to vector<1x128xf32>
    %c0_i32 = arith.constant 0 : i32
    %2 = arith.cmpi eq, %arg1, %c0_i32 : i32
    %3 = arith.extui %2 : i1 to i32
    %c0_i32_2 = arith.constant 0 : i32
    %4 = arith.cmpi ne, %3, %c0_i32_2 : i32
    scf.if %4 {
      %cst_16 = arith.constant 0.000000e+00 : f32
      %21 = vector.broadcast %cst_16 : f32 to vector<1x128xf32>
      %c0_17 = arith.constant 0 : index
      %c0_18 = arith.constant 0 : index
      %22 = vector.load %arg10[%c0_17, %c0_18] : memref<1x128xf32, #tpu.memory_space<vmem>>, vector<1x128xf32>
      tpu.vector_store %arg10[%c0_17, %c0_18], %21 {strides = array<i32>} : memref<1x128xf32, #tpu.memory_space<vmem>>, vector<1x128xf32>,
    } else {
    }
    %c0_3 = arith.constant 0 : index
    %c0_4 = arith.constant 0 : index
    %c0_5 = arith.constant 0 : index
    %5 = vector.load %arg2[%c0_3, %c0_4, %c0_5] : memref<1x256x36xbf16, #tpu.memory_space<vmem>>, vector<1x256x36xbf16>
    %6 = vector.shape_cast %5 : vector<1x256x36xbf16> to vector<256x36xbf16>
    %c0_6 = arith.constant 0 : index
    %c0_7 = arith.constant 0 : index
    %7 = vector.load %arg3[%c0_6, %c0_7] : memref<36x128xbf16, #tpu.memory_space<vmem>>, vector<36x128xbf16>
    %cst = arith.constant dense<0.000000e+00> : vector<256x128xf32>
    %8 = tpu.matmul %6, %7, %cst {dimension_numbers = #tpu.dot_dimension_numbers<[1], [0], [0], [1], [0, 0, 1, 1], [], []>} : vector<256x36xbf16>, vector<36x128xbf16>, vector<256x128xf32> -> vector<256x128xf32>
    %9 = vector.broadcast %1 : vector<1x128xf32> to vector<256x128xf32>
    %10 = arith.addf %8, %9 : vector<256x128xf32>
    %cst_8 = arith.constant 0.000000e+00 : f32
    %11 = vector.broadcast %cst_8 : f32 to vector<256x128xf32>
    %12 = arith.maximumf %10, %11 : vector<256x128xf32>
    %c0_9 = arith.constant 0 : index
    %c0_10 = arith.constant 0 : index
    %13 = vector.load %arg10[%c0_9, %c0_10] : memref<1x128xf32, #tpu.memory_space<vmem>>, vector<1x128xf32>
    %cst_11 = arith.constant dense<0.000000e+00> : vector<128xf32>
    %14 = vector.multi_reduction <add>, %12, %cst_11 [0] : vector<256x128xf32> to vector<128xf32>
    %15 = vector.shape_cast %14 : vector<128xf32> to vector<1x128xf32>
    %16 = arith.addf %13, %15 : vector<1x128xf32>
    %c0_12 = arith.constant 0 : index
    %c0_13 = arith.constant 0 : index
    %17 = vector.load %arg10[%c0_12, %c0_13] : memref<1x128xf32, #tpu.memory_space<vmem>>, vector<1x128xf32>
    tpu.vector_store %arg10[%c0_12, %c0_13], %16 {strides = array<i32>} : memref<1x128xf32, #tpu.memory_space<vmem>>, vector<1x128xf32>,
    %c0_i32_14 = arith.constant 0 : i32
    %18 = arith.cmpi eq, %arg1, %c0_i32_14 : i32
    %19 = arith.extui %18 : i1 to i32
    %c0_i32_15 = arith.constant 0 : i32
    %20 = arith.cmpi ne, %19, %c0_i32_15 : i32
    scf.if %20 {
      %c0_16 = arith.constant 0 : index
      %c0_17 = arith.constant 0 : index
      %21 = vector.load %arg10[%c0_16, %c0_17] : memref<1x128xf32, #tpu.memory_space<vmem>>, vector<1x128xf32>
      %cst_18 = arith.constant 3.906250e-03 : f32
      %22 = vector.broadcast %cst_18 : f32 to vector<1x128xf32>
      %23 = arith.mulf %21, %22 : vector<1x128xf32>
      %c0_19 = arith.constant 0 : index
      %c0_20 = arith.constant 0 : index
      %c0_21 = arith.constant 0 : index
      %24 = vector.load %arg9[%c0_19, %c0_20, %c0_21] : memref<1x1x128xf32, #tpu.memory_space<vmem>>, vector<1x1x128xf32>
      %25 = vector.shape_cast %24 : vector<1x1x128xf32> to vector<1x128xf32>
      %26 = vector.shape_cast %23 : vector<1x128xf32> to vector<1x1x128xf32>
      tpu.vector_store %arg9[%c0_19, %c0_20, %c0_21], %26 {strides = array<i32>} : memref<1x1x128xf32, #tpu.memory_space<vmem>>, vector<1x1x128xf32>,
      %c1 = arith.constant 1 : index
      %c0_22 = arith.constant 0 : index
      %c0_23 = arith.constant 0 : index
      %27 = vector.load %arg7[%c1, %c0_22, %c0_23] : memref<16x1x128xf32, #tpu.memory_space<vmem>>, vector<1x1x128xf32>
      %28 = vector.shape_cast %27 : vector<1x1x128xf32> to vector<1x128xf32>
      %c2 = arith.constant 2 : index
      %c0_24 = arith.constant 0 : index
      %c0_25 = arith.constant 0 : index
      %29 = vector.load %arg7[%c2, %c0_24, %c0_25] : memref<16x1x128xf32, #tpu.memory_space<vmem>>, vector<1x1x128xf32>
      %30 = vector.shape_cast %29 : vector<1x1x128xf32> to vector<1x128xf32>
      %c3 = arith.constant 3 : index
      %c0_26 = arith.constant 0 : index
      %c0_27 = arith.constant 0 : index
      %31 = vector.load %arg7[%c3, %c0_26, %c0_27] : memref<16x1x128xf32, #tpu.memory_space<vmem>>, vector<1x1x128xf32>
      %32 = vector.shape_cast %31 : vector<1x1x128xf32> to vector<1x128xf32>
      %c4 = arith.constant 4 : index
      %c0_28 = arith.constant 0 : index
      %c0_29 = arith.constant 0 : index
      %33 = vector.load %arg7[%c4, %c0_28, %c0_29] : memref<16x1x128xf32, #tpu.memory_space<vmem>>, vector<1x1x128xf32>
      %34 = vector.shape_cast %33 : vector<1x1x128xf32> to vector<1x128xf32>
      %c5 = arith.constant 5 : index
      %c0_30 = arith.constant 0 : index
      %c0_31 = arith.constant 0 : index
      %35 = vector.load %arg7[%c5, %c0_30, %c0_31] : memref<16x1x128xf32, #tpu.memory_space<vmem>>, vector<1x1x128xf32>
      %36 = vector.shape_cast %35 : vector<1x1x128xf32> to vector<1x128xf32>
      %c6 = arith.constant 6 : index
      %c0_32 = arith.constant 0 : index
      %c0_33 = arith.constant 0 : index
      %37 = vector.load %arg7[%c6, %c0_32, %c0_33] : memref<16x1x128xf32, #tpu.memory_space<vmem>>, vector<1x1x128xf32>
      %38 = vector.shape_cast %37 : vector<1x1x128xf32> to vector<1x128xf32>
      %c7 = arith.constant 7 : index
      %c0_34 = arith.constant 0 : index
      %c0_35 = arith.constant 0 : index
      %39 = vector.load %arg7[%c7, %c0_34, %c0_35] : memref<16x1x128xf32, #tpu.memory_space<vmem>>, vector<1x1x128xf32>
      %40 = vector.shape_cast %39 : vector<1x1x128xf32> to vector<1x128xf32>
      %c8 = arith.constant 8 : index
      %c0_36 = arith.constant 0 : index
      %c0_37 = arith.constant 0 : index
      %41 = vector.load %arg7[%c8, %c0_36, %c0_37] : memref<16x1x128xf32, #tpu.memory_space<vmem>>, vector<1x1x128xf32>
      %42 = vector.shape_cast %41 : vector<1x1x128xf32> to vector<1x128xf32>
      %c9 = arith.constant 9 : index
      %c0_38 = arith.constant 0 : index
      %c0_39 = arith.constant 0 : index
      %43 = vector.load %arg7[%c9, %c0_38, %c0_39] : memref<16x1x128xf32, #tpu.memory_space<vmem>>, vector<1x1x128xf32>
      %44 = vector.shape_cast %43 : vector<1x1x128xf32> to vector<1x128xf32>
      %c10 = arith.constant 10 : index
      %c0_40 = arith.constant 0 : index
      %c0_41 = arith.constant 0 : index
      %45 = vector.load %arg7[%c10, %c0_40, %c0_41] : memref<16x1x128xf32, #tpu.memory_space<vmem>>, vector<1x1x128xf32>
      %46 = vector.shape_cast %45 : vector<1x1x128xf32> to vector<1x128xf32>
      %47 = arith.truncf %23 : vector<1x128xf32> to vector<1x128xbf16>
      %c0_42 = arith.constant 0 : index
      %c0_43 = arith.constant 0 : index
      %48 = vector.load %arg4[%c0_42, %c0_43] : memref<128x256xbf16, #tpu.memory_space<vmem>>, vector<128x256xbf16>
      %cst_44 = arith.constant dense<0.000000e+00> : vector<1x256xf32>
      %49 = tpu.matmul %47, %48, %cst_44 {dimension_numbers = #tpu.dot_dimension_numbers<[1], [0], [0], [1], [0, 0, 1, 1], [], []>} : vector<1x128xbf16>, vector<128x256xbf16>, vector<1x256xf32> -> vector<1x256xf32>
      %50 = vector.extract_strided_slice %49 {offsets = [0, 0], sizes = [1, 128], strides = [1, 1]} : vector<1x256xf32> to vector<1x128xf32>
      %51 = arith.addf %50, %28 : vector<1x128xf32>
      %52 = vector.extract_strided_slice %49 {offsets = [0, 128], sizes = [1, 128], strides = [1, 1]} : vector<1x256xf32> to vector<1x128xf32>
      %53 = arith.addf %52, %30 : vector<1x128xf32>
      %54 = arith.truncf %51 : vector<1x128xf32> to vector<1x128xbf16>
      %c0_45 = arith.constant 0 : index
      %c0_46 = arith.constant 0 : index
      %55 = vector.load %arg5[%c0_45, %c0_46] : memref<128x128xbf16, #tpu.memory_space<vmem>>, vector<128x128xbf16>
      %cst_47 = arith.constant dense<0.000000e+00> : vector<1x128xf32>
      %56 = tpu.matmul %54, %55, %cst_47 {dimension_numbers = #tpu.dot_dimension_numbers<[1], [0], [0], [1], [0, 0, 1, 1], [], []>} : vector<1x128xbf16>, vector<128x128xbf16>, vector<1x128xf32> -> vector<1x128xf32>
      %57 = arith.addf %56, %32 : vector<1x128xf32>
      %58 = arith.negf %57 : vector<1x128xf32>
      %59 = math.exp %58 : vector<1x128xf32>
      %cst_48 = arith.constant 1.000000e+00 : f32
      %60 = vector.broadcast %cst_48 : f32 to vector<1x128xf32>
      %61 = arith.addf %60, %59 : vector<1x128xf32>
      %62 = arith.divf %60, %61 : vector<1x128xf32>
      %63 = arith.mulf %53, %62 : vector<1x128xf32>
      %64 = tpu.concatenate %51, %53, %63 in 1 : vector<1x128xf32>, vector<1x128xf32>, vector<1x128xf32> -> vector<1x384xf32>
      %65 = arith.truncf %64 : vector<1x384xf32> to vector<1x384xbf16>
      %c0_49 = arith.constant 0 : index
      %c0_50 = arith.constant 0 : index
      %66 = vector.load %arg6[%c0_49, %c0_50] : memref<384x128xbf16, #tpu.memory_space<vmem>>, vector<384x128xbf16>
      %cst_51 = arith.constant dense<0.000000e+00> : vector<1x128xf32>
      %67 = tpu.matmul %65, %66, %cst_51 {dimension_numbers = #tpu.dot_dimension_numbers<[1], [0], [0], [1], [0, 0, 1, 1], [], []>} : vector<1x384xbf16>, vector<384x128xbf16>, vector<1x128xf32> -> vector<1x128xf32>
      %68 = arith.addf %67, %34 : vector<1x128xf32>
      %69 = arith.mulf %68, %36 : vector<1x128xf32>
      %70 = arith.addf %69, %38 : vector<1x128xf32>
      %cst_52 = arith.constant 0.000000e+00 : f32
      %71 = vector.broadcast %cst_52 : f32 to vector<1x128xf32>
      %72 = arith.maximumf %70, %71 : vector<1x128xf32>
      %cst_53 = arith.constant 0.000000e+00 : f32
      %73 = vector.broadcast %cst_53 : f32 to vector<1x128xf32>
      %74 = arith.minimumf %70, %73 : vector<1x128xf32>
      %75 = arith.mulf %40, %74 : vector<1x128xf32>
      %76 = arith.addf %72, %75 : vector<1x128xf32>
      %77 = arith.mulf %76, %42 : vector<1x128xf32>
      %78 = arith.addf %77, %44 : vector<1x128xf32>
      %cst_54 = arith.constant dense<0.000000e+00> : vector<1xf32>
      %79 = vector.multi_reduction <add>, %78, %cst_54 [1] : vector<1x128xf32> to vector<1xf32>
      %80 = vector.shape_cast %79 : vector<1xf32> to vector<1x1xf32>
      %cst_55 = arith.constant 0.000000e+00 : f32
      %81 = vector.broadcast %cst_55 : f32 to vector<1x1xf32>
      %82 = arith.maximumf %80, %81 : vector<1x1xf32>
      %cst_56 = arith.constant 0.000000e+00 : f32
      %83 = vector.broadcast %cst_56 : f32 to vector<1x1xf32>
      %84 = arith.minimumf %80, %83 : vector<1x1xf32>
      %85 = vector.broadcast %84 : vector<1x1xf32> to vector<1x128xf32>
      %86 = arith.mulf %46, %85 : vector<1x128xf32>
      %87 = vector.broadcast %82 : vector<1x1xf32> to vector<1x128xf32>
      %88 = arith.addf %87, %86 : vector<1x128xf32>
      %c0_57 = arith.constant 0 : index
      %c0_58 = arith.constant 0 : index
      %c0_59 = arith.constant 0 : index
      %89 = vector.load %arg8[%c0_57, %c0_58, %c0_59] : memref<1x1x128xf32, #tpu.memory_space<vmem>>, vector<1x1x128xf32>
      %90 = vector.shape_cast %89 : vector<1x1x128xf32> to vector<1x128xf32>
      %91 = vector.shape_cast %88 : vector<1x128xf32> to vector<1x1x128xf32>
      tpu.vector_store %arg8[%c0_57, %c0_58, %c0_59], %91 {strides = array<i32>} : memref<1x1x128xf32, #tpu.memory_space<vmem>>, vector<1x1x128xf32>,
    } else {
    }
    return
  }
  func.func @transform_0(%arg0: i32, %arg1: i32) -> (i32, i32, i32) {
    %c0_i32 = arith.constant 0 : i32
    %c0_i32_0 = arith.constant 0 : i32
    return %arg0, %arg1, %c0_i32 : i32, i32, i32
  }
  func.func @transform_1(%arg0: i32, %arg1: i32) -> (i32, i32) {
    %c0_i32 = arith.constant 0 : i32
    %c0_i32_0 = arith.constant 0 : i32
    %c0_i32_1 = arith.constant 0 : i32
    return %c0_i32, %c0_i32_0 : i32, i32
  }
  func.func @transform_2(%arg0: i32, %arg1: i32) -> (i32, i32) {
    %c0_i32 = arith.constant 0 : i32
    %c0_i32_0 = arith.constant 0 : i32
    %c0_i32_1 = arith.constant 0 : i32
    return %c0_i32, %c0_i32_0 : i32, i32
  }
  func.func @transform_3(%arg0: i32, %arg1: i32) -> (i32, i32) {
    %c0_i32 = arith.constant 0 : i32
    %c0_i32_0 = arith.constant 0 : i32
    %c0_i32_1 = arith.constant 0 : i32
    return %c0_i32, %c0_i32_0 : i32, i32
  }
  func.func @transform_4(%arg0: i32, %arg1: i32) -> (i32, i32) {
    %c0_i32 = arith.constant 0 : i32
    %c0_i32_0 = arith.constant 0 : i32
    %c0_i32_1 = arith.constant 0 : i32
    return %c0_i32, %c0_i32_0 : i32, i32
  }
  func.func @transform_5(%arg0: i32, %arg1: i32) -> (i32, i32, i32) {
    %c0_i32 = arith.constant 0 : i32
    %c0_i32_0 = arith.constant 0 : i32
    %c0_i32_1 = arith.constant 0 : i32
    %c0_i32_2 = arith.constant 0 : i32
    return %c0_i32, %c0_i32_0, %c0_i32_1 : i32, i32, i32
  }
  func.func @transform_6(%arg0: i32, %arg1: i32) -> (i32, i32, i32) {
    %c0_i32 = arith.constant 0 : i32
    %c0_i32_0 = arith.constant 0 : i32
    %c0_i32_1 = arith.constant 0 : i32
    return %arg0, %c0_i32, %c0_i32_0 : i32, i32, i32
  }
  func.func @transform_7(%arg0: i32, %arg1: i32) -> (i32, i32, i32) {
    %c0_i32 = arith.constant 0 : i32
    %c0_i32_0 = arith.constant 0 : i32
    %c0_i32_1 = arith.constant 0 : i32
    return %arg0, %c0_i32, %c0_i32_0 : i32, i32, i32
  }
}

</mosaic_0001>

<llo_original>
// kernel: extratcter_map_forward.1
$region0: #{extratcter_map_forward.1}
  #allocation0 [shape = 'u32[]', space=smem, size = 0x4, offset = 0x4, fixed_abs, tag = 'smem constant byte address 0x4 - core index']
  #allocation1 [shape = 'u32[144,128]{1,0:T(1,128)}', space=vmem, size = 0x12000, scoped, tag = 'internal scratch']
  #allocation2 [shape = 'f32[1,128]{1,0:T(1,128)}', space=vmem, size = 0x200, scoped, tag = 'scratch operand']
  %s0 = inlined_call_operand.vmem [shape: bf16[2,256,36], index: 0, kind: input, shape index: {}]
  %s1 = inlined_call_operand.vmem [shape: bf16[36,128], index: 1, kind: input, shape index: {}]
  %s2 = inlined_call_operand.vmem [shape: bf16[128,256], index: 2, kind: input, shape index: {}]
  %s3 = inlined_call_operand.vmem [shape: bf16[128,128], index: 3, kind: input, shape index: {}]
  %s4 = inlined_call_operand.vmem [shape: bf16[384,128], index: 4, kind: input, shape index: {}]
  %s5 = inlined_call_operand.vmem [shape: f32[16,1,128], index: 5, kind: input, shape index: {}]
  %s6 = inlined_call_operand.vmem [shape: f32[2,1,128], index: 6, kind: output, shape index: {0}]
  %s7 = inlined_call_operand.hbm [shape: f32[2,1,128], index: 7, kind: output, shape index: {1}]
  %8 = xla_tuple %s6, %s7
  %s9 = sld [smem:[#allocation0]]
  $region73: #{extratcter_map_forward.1} parent=0
    _
  %s11 = ssub.s32 1, %s9
  %s12 = scalar_select 0, %s11, %s9
  $region1: #{extratcter_map_forward.1} parent=0
    #allocation3 [shape = 'u8[1024]{0}', space=vmem, size = 0x400, scoped, tag = 'output window, operand 1']
    #allocation4 [shape = 's32[2]{0}', space=sflag, size = 0x8, scoped, tag = 'scoped memory for extratcter_map_forward.1']
    %13 = vsyncpa [#allocation4], 0
    %s14 = scalar_lea.sflag [#allocation4], 1
    %15 = vsyncpa %s14, 0
    loop: start=0, step=1, limit=4
    $region2: #{extratcter_map_forward.1} parent=1 // loop_pre_header
      _
    $region3: #{extratcter_map_forward.1} parent=1 // loop_header
      %s17 = sphi 0, %s21
      %p18 = scmp.ge.s32.totalorder %s17, 4
      %s24 = sphi 0, %s36
      %s25 = sphi 0, %s32
      %s26 = sphi 0, %s24
      %s27 = sphi 0, %s25
      %s28 = sphi 0, %s26
      %s29 = sphi 0, %s27
      %s41 = sphi 0, %s43
      %s44 = sphi 0, %s41
      %s45 = sphi 0, %s44
      %s61 = sphi 0, %s45
      %s65 = sphi 0, %s65
      %s67 = sphi 0, %s65
      %s68 = sphi 0, %s67
      %s82 = sphi 0, %s68
      %s86 = sphi 0, %s86
      %s88 = sphi 0, %s86
      %s89 = sphi 0, %s88
      %s103 = sphi 0, %s89
      %s107 = sphi 0, %s107
      %s109 = sphi 0, %s107
      %s110 = sphi 0, %s109
      %s124 = sphi 0, %s110
      %s128 = sphi 0, %s128
      %s130 = sphi 0, %s128
      %s131 = sphi 0, %s130
      %s145 = sphi 0, %s131
      %s149 = sphi 0, %s149
      %s151 = sphi 0, %s149
      %s152 = sphi 0, %s151
      %s166 = sphi 0, %s152
      %s172 = sphi 0, %s174
      %s175 = sphi 0, %s172
      %s176 = sphi 0, %s175
      %s192 = sphi 0, %s176
      %s198 = sphi 0, %s200
      %s201 = sphi 0, %s198
      %s202 = sphi 0, %s201
      %s218 = sphi 0, %s202
    $region4: #{extratcter_map_forward.1} parent=1 // loop_header_branch
      %20 = sbr.rel (%p18) target = $region8
    $region5: #{extratcter_map_forward.1} parent=1 // loop_body
      %s22 = ssub.s32 %s17, 1
      %s23 = ssub.s32 %s17, 2
      %s30 = sadd.s32 1, %s25
      %p31 = scmp.ge.s32.totalorder %s30, 1
      %s32 = scalar_select %p31, 0, %s30
      %s33 = sadd.s32 1, %s24
      %s34 = scalar_select %p31, %s33, %s24
      %p35 = scmp.ge.s32.totalorder %s34, 2
      %s36 = scalar_select %p35, 0, %s34
      %s37 = ssub.s32 %s24, %s36
      %s38 = ssub.s32 %s25, %s32
      %s39 = sor.u32 %s37, %s38
      %p40 = scmp.eq.s32.totalorder %s39, 0
      %s42 = sadd.s32 %s41, 1
      %s43 = scalar_select %p40, %s41, %s42
      %p46 = pneg %p40
      %p47 = scmp.eq.s32.totalorder %s17, 1
      %p48 = por %p46, %p47
      %p49 = scmp.ne.s32.totalorder %s41, %s44
      %p50 = scmp.eq.s32.totalorder %s17, 0
      %p51 = por %p49, %p50
      %p52 = scmp.ne.s32.totalorder %s41, %s44
      %p53 = scmp.eq.s32.totalorder %s22, 1
      %p54 = por %p52, %p53
      %p55 = scmp.ne.s32.totalorder %s44, %s45
      %p56 = scmp.eq.s32.totalorder %s22, 0
      %p57 = por %p55, %p56
      %p58 = scmp.ne.s32.totalorder %s44, %s45
      %p59 = scmp.eq.s32.totalorder %s23, 1
      %p60 = por %p58, %p59
      %p62 = scmp.ne.s32.totalorder %s45, %s61
      %p63 = scmp.eq.s32.totalorder %s23, 0
      %p64 = por %p62, %p63
      %s66 = sadd.s32 %s65, 1
      %p69 = scmp.eq.s32.totalorder %s17, 1
      %p70 = scmp.ne.s32.totalorder %s65, %s67
      %p71 = scmp.eq.s32.totalorder %s17, 0
      %p72 = por %p70, %p71
      %p73 = scmp.ne.s32.totalorder %s65, %s67
      %p74 = scmp.eq.s32.totalorder %s22, 1
      %p75 = por %p73, %p74
      %p76 = scmp.ne.s32.totalorder %s67, %s68
      %p77 = scmp.eq.s32.totalorder %s22, 0
      %p78 = por %p76, %p77
      %p79 = scmp.ne.s32.totalorder %s67, %s68
      %p80 = scmp.eq.s32.totalorder %s23, 1
      %p81 = por %p79, %p80
      %p83 = scmp.ne.s32.totalorder %s68, %s82
      %p84 = scmp.eq.s32.totalorder %s23, 0
      %p85 = por %p83, %p84
      %s87 = sadd.s32 %s86, 1
      %p90 = scmp.eq.s32.totalorder %s17, 1
      %p91 = scmp.ne.s32.totalorder %s86, %s88
      %p92 = scmp.eq.s32.totalorder %s17, 0
      %p93 = por %p91, %p92
      %p94 = scmp.ne.s32.totalorder %s86, %s88
      %p95 = scmp.eq.s32.totalorder %s22, 1
      %p96 = por %p94, %p95
      %p97 = scmp.ne.s32.totalorder %s88, %s89
      %p98 = scmp.eq.s32.totalorder %s22, 0
      %p99 = por %p97, %p98
      %p100 = scmp.ne.s32.totalorder %s88, %s89
      %p101 = scmp.eq.s32.totalorder %s23, 1
      %p102 = por %p100, %p101
      %p104 = scmp.ne.s32.totalorder %s89, %s103
      %p105 = scmp.eq.s32.totalorder %s23, 0
      %p106 = por %p104, %p105
      %s108 = sadd.s32 %s107, 1
      %p111 = scmp.eq.s32.totalorder %s17, 1
      %p112 = scmp.ne.s32.totalorder %s107, %s109
      %p113 = scmp.eq.s32.totalorder %s17, 0
      %p114 = por %p112, %p113
      %p115 = scmp.ne.s32.totalorder %s107, %s109
      %p116 = scmp.eq.s32.totalorder %s22, 1
      %p117 = por %p115, %p116
      %p118 = scmp.ne.s32.totalorder %s109, %s110
      %p119 = scmp.eq.s32.totalorder %s22, 0
      %p120 = por %p118, %p119
      %p121 = scmp.ne.s32.totalorder %s109, %s110
      %p122 = scmp.eq.s32.totalorder %s23, 1
      %p123 = por %p121, %p122
      %p125 = scmp.ne.s32.totalorder %s110, %s124
      %p126 = scmp.eq.s32.totalorder %s23, 0
      %p127 = por %p125, %p126
      %s129 = sadd.s32 %s128, 1
      %p132 = scmp.eq.s32.totalorder %s17, 1
      %p133 = scmp.ne.s32.totalorder %s128, %s130
      %p134 = scmp.eq.s32.totalorder %s17, 0
      %p135 = por %p133, %p134
      %p136 = scmp.ne.s32.totalorder %s128, %s130
      %p137 = scmp.eq.s32.totalorder %s22, 1
      %p138 = por %p136, %p137
      %p139 = scmp.ne.s32.totalorder %s130, %s131
      %p140 = scmp.eq.s32.totalorder %s22, 0
      %p141 = por %p139, %p140
      %p142 = scmp.ne.s32.totalorder %s130, %s131
      %p143 = scmp.eq.s32.totalorder %s23, 1
      %p144 = por %p142, %p143
      %p146 = scmp.ne.s32.totalorder %s131, %s145
      %p147 = scmp.eq.s32.totalorder %s23, 0
      %p148 = por %p146, %p147
      %s150 = sadd.s32 %s149, 1
      %p153 = scmp.eq.s32.totalorder %s17, 1
      %p154 = scmp.ne.s32.totalorder %s149, %s151
      %p155 = scmp.eq.s32.totalorder %s17, 0
      %p156 = por %p154, %p155
      %p157 = scmp.ne.s32.totalorder %s149, %s151
      %p158 = scmp.eq.s32.totalorder %s22, 1
      %p159 = por %p157, %p158
      %p160 = scmp.ne.s32.totalorder %s151, %s152
      %p161 = scmp.eq.s32.totalorder %s22, 0
      %p162 = por %p160, %p161
      %p163 = scmp.ne.s32.totalorder %s151, %s152
      %p164 = scmp.eq.s32.totalorder %s23, 1
      %p165 = por %p163, %p164
      %p167 = scmp.ne.s32.totalorder %s152, %s166
      %p168 = scmp.eq.s32.totalorder %s23, 0
      %p169 = por %p167, %p168
      %s170 = ssub.s32 %s24, %s36
      %p171 = scmp.eq.s32.totalorder %s170, 0
      %s173 = sadd.s32 %s172, 1
      %s174 = scalar_select %p171, %s172, %s173
      %p177 = pneg %p171
      %p178 = scmp.eq.s32.totalorder %s17, 1
      %p179 = por %p177, %p178
      %p180 = scmp.ne.s32.totalorder %s172, %s175
      %p181 = scmp.eq.s32.totalorder %s17, 0
      %p182 = por %p180, %p181
      %p183 = scmp.ne.s32.totalorder %s172, %s175
      %p184 = scmp.eq.s32.totalorder %s22, 1
      %p185 = por %p183, %p184
      %p186 = scmp.ne.s32.totalorder %s175, %s176
      %p187 = scmp.eq.s32.totalorder %s22, 0
      %p188 = por %p186, %p187
      %p189 = scmp.ne.s32.totalorder %s175, %s176
      %p190 = scmp.eq.s32.totalorder %s23, 1
      %p191 = por %p189, %p190
      %p193 = scmp.ne.s32.totalorder %s176, %s192
      %p194 = scmp.eq.s32.totalorder %s23, 0
      %p195 = por %p193, %p194
      %s196 = ssub.s32 %s24, %s36
      %p197 = scmp.eq.s32.totalorder %s196, 0
      %s199 = sadd.s32 %s198, 1
      %s200 = scalar_select %p197, %s198, %s199
      %p203 = pneg %p197
      %p204 = scmp.eq.s32.totalorder %s17, 1
      %p205 = por %p203, %p204
      %p206 = scmp.ne.s32.totalorder %s198, %s201
      %p207 = scmp.eq.s32.totalorder %s17, 0
      %p208 = por %p206, %p207
      %p209 = scmp.ne.s32.totalorder %s198, %s201
      %p210 = scmp.eq.s32.totalorder %s22, 1
      %p211 = por %p209, %p210
      %p212 = scmp.ne.s32.totalorder %s201, %s202
      %p213 = scmp.eq.s32.totalorder %s22, 0
      %p214 = por %p212, %p213
      %p215 = scmp.ne.s32.totalorder %s201, %s202
      %p216 = scmp.eq.s32.totalorder %s23, 1
      %p217 = por %p215, %p216
      %p219 = scmp.ne.s32.totalorder %s202, %s218
      %p220 = scmp.eq.s32.totalorder %s23, 0
      %p221 = por %p219, %p220
      %p222 = scmp.le.s32.totalorder 1, %s17
      %p223 = scmp.lt.s32.totalorder %s17, 3
      %p224 = pnand %p222, %p223
      %p225 = pneg %p224
      // Predicated region
      $region9: #{extratcter_map_forward.1} parent=5 // pred_check
        _
      $region10: #{extratcter_map_forward.1} parent=5 // pred_check_branch
        %227 = sbr.rel (%p224) target = $region12
      $region11: #{extratcter_map_forward.1} parent=5 // pred_region
        %s228 = ssub.s32 %s17, 1
        // Predicated region
        $region13: #{extratcter_map_forward.1} parent=11 // pred_check
          %p229 = pneg %p78
        $region14: #{extratcter_map_forward.1} parent=11 // pred_check_branch
          %231 = sbr.rel (%p229) target = $region16
        $region15: #{extratcter_map_forward.1} parent=11 // pred_region
          _
        $region16: #{extratcter_map_forward.1} parent=11 // pred_fallthru
          _
        // Predicated region
        $region17: #{extratcter_map_forward.1} parent=11 // pred_check
          %p232 = pneg %p99
        $region18: #{extratcter_map_forward.1} parent=11 // pred_check_branch
          %234 = sbr.rel (%p232) target = $region20
        $region19: #{extratcter_map_forward.1} parent=11 // pred_region
          _
        $region20: #{extratcter_map_forward.1} parent=11 // pred_fallthru
          _
        // Predicated region
        $region21: #{extratcter_map_forward.1} parent=11 // pred_check
          %p235 = pneg %p120
        $region22: #{extratcter_map_forward.1} parent=11 // pred_check_branch
          %237 = sbr.rel (%p235) target = $region24
        $region23: #{extratcter_map_forward.1} parent=11 // pred_region
          _
        $region24: #{extratcter_map_forward.1} parent=11 // pred_fallthru
          _
        // Predicated region
        $region25: #{extratcter_map_forward.1} parent=11 // pred_check
          %p238 = pneg %p141
        $region26: #{extratcter_map_forward.1} parent=11 // pred_check_branch
          %240 = sbr.rel (%p238) target = $region28
        $region27: #{extratcter_map_forward.1} parent=11 // pred_region
          _
        $region28: #{extratcter_map_forward.1} parent=11 // pred_fallthru
          _
        // Predicated region
        $region29: #{extratcter_map_forward.1} parent=11 // pred_check
          %p241 = pneg %p162
        $region30: #{extratcter_map_forward.1} parent=11 // pred_check_branch
          %243 = sbr.rel (%p241) target = $region32
        $region31: #{extratcter_map_forward.1} parent=11 // pred_region
          _
        $region32: #{extratcter_map_forward.1} parent=11 // pred_fallthru
          _
      $region12: #{extratcter_map_forward.1} parent=5 // pred_fallthru
        _
      %p244 = scmp.lt.s32.totalorder %s17, 2
      // Predicated region
      $region33: #{extratcter_map_forward.1} parent=5 // pred_check
        %p245 = pneg %p244
      $region34: #{extratcter_map_forward.1} parent=5 // pred_check_branch
        %247 = sbr.rel (%p245) target = $region36
      $region35: #{extratcter_map_forward.1} parent=5 // pred_region
        // Predicated region
        $region37: #{extratcter_map_forward.1} parent=35 // pred_check
          %p248 = pneg %p51
        $region38: #{extratcter_map_forward.1} parent=35 // pred_check_branch
          %250 = sbr.rel (%p248) target = $region40
        $region39: #{extratcter_map_forward.1} parent=35 // pred_region
          %s251 = smul.u32 32, %s25
          %p252 = scmp.lt.s32.totalorder %s24, 1
          %s253 = scalar_select %p252, %s24, 1
          %p254 = scmp.lt.s32.totalorder %s251, 31
          %s255 = scalar_select %p254, %s251, 31
          %s256 = smul.addr %s253, 32
          %s257 = sadd.s32 %s255, %s256
          %s258 = smul.addr %s257, 4
          %s259 = scalar_lea.vmem %s0, %s258
          %s260 = smul.u32 32, %s25
        $region40: #{extratcter_map_forward.1} parent=35 // pred_fallthru
          _
      $region36: #{extratcter_map_forward.1} parent=5 // pred_fallthru
        _
      %p261 = scmp.le.s32.totalorder 1, %s17
      %p262 = scmp.lt.s32.totalorder %s17, 3
      %p263 = pnand %p261, %p262
      %p264 = pneg %p263
      // Predicated region
      $region41: #{extratcter_map_forward.1} parent=5 // pred_check
        _
      $region42: #{extratcter_map_forward.1} parent=5 // pred_check_branch
        %266 = sbr.rel (%p263) target = $region44
      $region43: #{extratcter_map_forward.1} parent=5 // pred_region
        %s267 = ssub.s32 %s17, 1
        %s268 = smul.u32 32, %s27
        %p269 = scmp.lt.s32.totalorder %s26, 1
        %s270 = scalar_select %p269, %s26, 1
        %p271 = scmp.lt.s32.totalorder %s268, 31
        %s272 = scalar_select %p271, %s268, 31
        %s273 = smul.addr %s270, 32
        %s274 = sadd.s32 %s272, %s273
        %s275 = smul.addr %s274, 4
        %s276 = scalar_lea.vmem %s0, %s275
        %p277 = pneg %p57
        %p278 = pneg %p54
        %p279 = pneg %p78
        %p280 = pneg %p75
        %p281 = pneg %p99
        %p282 = pneg %p96
        %p283 = pneg %p120
        %p284 = pneg %p117
        %p285 = pneg %p141
        %p286 = pneg %p138
        %p287 = pneg %p162
        %p288 = pneg %p159
        %p289 = pneg %p188
        %p290 = pneg %p185
        %p291 = scmp.lt.s32.totalorder %s26, 1
        %s292 = scalar_select %p291, %s26, 1
        %s293 = scalar_lea.vmem %s6, %s292
        %p294 = pneg %p214
        %p295 = pneg %p211
        %s296 = sand.u32 %s201, 1
        %s297 = scalar_lea.sflag [#allocation4], %s296
        %s298 = sand.u32 %s201, 1
        %s299 = scalar_lea.vmem [#allocation3], %s298
        %s300 = smul.u32 32, %s27
        %p301 = scmp.lt.s32.totalorder %s26, 1
        %s302 = scalar_select %p301, %s26, 1
        %p303 = scmp.lt.s32.totalorder %s300, 31
        %s304 = scalar_select %p303, %s300, 31
        %s305 = smul.addr %s302, 32
        %s306 = sadd.s32 %s304, %s305
        %s307 = smul.addr %s306, 4
        %s308 = scalar_lea.vmem %s0, %s307
        %s309 = smul.u32 32, %s27
        %p310 = scmp.lt.s32.totalorder %s26, 1
        %s311 = scalar_select %p310, %s26, 1
        %s312 = scalar_lea.vmem %s6, %s311
        %v314 = vld [vmem:[%s5] sm:$0x1]
        %p315 = scmp.eq.s32.totalorder %s27, 0
        // Predicated region
        $region45: #{extratcter_map_forward.1} parent=43 // pred_check
          %p316 = pneg %p315
        $region46: #{extratcter_map_forward.1} parent=43 // pred_check_branch
          %318 = sbr.rel (%p316) target = $region48
        $region47: #{extratcter_map_forward.1} parent=43 // pred_region
          %319 = vst [vmem:[#allocation2] sm:$0x1] 0.0
        $region48: #{extratcter_map_forward.1} parent=43 // pred_fallthru
          _
        %v320 = vld [vmem:[%s308] sm:$0xf]
        %v321 = vld [vmem:[%s308 + $0x4] sm:$0xf]
        %v322 = vld [vmem:[%s308 + $0x8] sm:$0xf]
        %v323 = vld [vmem:[%s308 + $0xc] sm:$0xf]
        %v324 = vld [vmem:[%s308 + $0x10] sm:$0xf]
        %v325 = vld [vmem:[%s308 + $0x14] sm:$0xf]
        %v326 = vld [vmem:[%s308 + $0x18] sm:$0xf]
        %v327 = vld [vmem:[%s308 + $0x1c] sm:$0xf]
        %v328 = vld [vmem:[%s308 + $0x20] sm:$0xf]
        %v329 = vld [vmem:[%s308 + $0x24] sm:$0xf]
        %v330 = vld [vmem:[%s308 + $0x28] sm:$0xf]
        %v331 = vld [vmem:[%s308 + $0x2c] sm:$0xf]
        %v332 = vld [vmem:[%s308 + $0x30] sm:$0xf]
        %v333 = vld [vmem:[%s308 + $0x34] sm:$0xf]
        %v334 = vld [vmem:[%s308 + $0x38] sm:$0xf]
        %v335 = vld [vmem:[%s308 + $0x3c] sm:$0xf]
        %v336 = vld [vmem:[%s308 + $0x40] sm:$0xf]
        %v337 = vld [vmem:[%s308 + $0x44] sm:$0xf]
        %v338 = vld [vmem:[%s308 + $0x48] sm:$0xf]
        %v339 = vld [vmem:[%s308 + $0x4c] sm:$0xf]
        %v340 = vld [vmem:[%s308 + $0x50] sm:$0xf]
        %v341 = vld [vmem:[%s308 + $0x54] sm:$0xf]
        %v342 = vld [vmem:[%s308 + $0x58] sm:$0xf]
        %v343 = vld [vmem:[%s308 + $0x5c] sm:$0xf]
        %v344 = vld [vmem:[%s308 + $0x60] sm:$0xf]
        %v345 = vld [vmem:[%s308 + $0x64] sm:$0xf]
        %v346 = vld [vmem:[%s308 + $0x68] sm:$0xf]
        %v347 = vld [vmem:[%s308 + $0x6c] sm:$0xf]
        %v348 = vld [vmem:[%s308 + $0x70] sm:$0xf]
        %v349 = vld [vmem:[%s308 + $0x74] sm:$0xf]
        %v350 = vld [vmem:[%s308 + $0x78] sm:$0xf]
        %v351 = vld [vmem:[%s308 + $0x7c] sm:$0xf]
        %v352 = vld [vmem:[%s1] sm:$0xf]
        %v353 = vld [vmem:[%s1 + $0x4] sm:$0xf]
        %v354 = vld [vmem:[%s1 + $0x8] sm:$0xf]
        %v355 = vld [vmem:[%s1 + $0xc] sm:$0xf]
        %v356 = vld [vmem:[%s1 + $0x10] sm:$0x3]
        %v358 = vlaneseq
        %v359 = vshrl.u32 %v358, 7
        %v360 = vsub.s32 0, %v359
        %v361 = vrot.slane %v314, %v360
        %v395 = vunpack.c.l.b16 %v320
        %v396 = vunpack.c.l.b16 %v321
        %v397 = vunpack.c.l.b16 %v322
        %v398 = vunpack.c.l.b16 %v323
        %v399 = vunpack.c.l.b16 %v324
        %v400 = vunpack.c.l.b16 %v325
        %v401 = vunpack.c.l.b16 %v326
        %v402 = vunpack.c.l.b16 %v327
        %v403 = vunpack.c.l.b16 %v328
        %v404 = vunpack.c.l.b16 %v329
        %v405 = vunpack.c.l.b16 %v330
        %v406 = vunpack.c.l.b16 %v331
        %v407 = vunpack.c.l.b16 %v332
        %v408 = vunpack.c.l.b16 %v333
        %v409 = vunpack.c.l.b16 %v334
        %v410 = vunpack.c.l.b16 %v335
        %v411 = vunpack.c.l.b16 %v336
        %v412 = vunpack.c.l.b16 %v337
        %v413 = vunpack.c.l.b16 %v338
        %v414 = vunpack.c.l.b16 %v339
        %v415 = vunpack.c.l.b16 %v340
        %v416 = vunpack.c.l.b16 %v341
        %v417 = vunpack.c.l.b16 %v342
        %v418 = vunpack.c.l.b16 %v343
        %v419 = vunpack.c.l.b16 %v344
        %v420 = vunpack.c.l.b16 %v345
        %v421 = vunpack.c.l.b16 %v346
        %v422 = vunpack.c.l.b16 %v347
        %v423 = vunpack.c.l.b16 %v348
        %v424 = vunpack.c.l.b16 %v349
        %v425 = vunpack.c.l.b16 %v350
        %v426 = vunpack.c.l.b16 %v351
        %v427 = vpack.c.b16 %v396, %v395
        %v428 = vpack.c.b16 %v398, %v397
        %v429 = vpack.c.b16 %v400, %v399
        %v430 = vpack.c.b16 %v402, %v401
        %v431 = vpack.c.b16 %v404, %v403
        %v432 = vpack.c.b16 %v406, %v405
        %v433 = vpack.c.b16 %v408, %v407
        %v434 = vpack.c.b16 %v410, %v409
        %v435 = vpack.c.b16 %v412, %v411
        %v436 = vpack.c.b16 %v414, %v413
        %v437 = vpack.c.b16 %v416, %v415
        %v438 = vpack.c.b16 %v418, %v417
        %v439 = vpack.c.b16 %v420, %v419
        %v440 = vpack.c.b16 %v422, %v421
        %v441 = vpack.c.b16 %v424, %v423
        %v442 = vpack.c.b16 %v426, %v425
        %v448 = vunpack.c.l.b16 %v352
        %v449 = vunpack.c.l.b16 %v353
        %v450 = vunpack.c.l.b16 %v354
        %v451 = vunpack.c.l.b16 %v355
        %v452 = vunpack.c.l.b16 %v356
        %v453 = vpack.c.b16 %v449, %v448
        %v454 = vpack.c.b16 %v451, %v450
        %v455 = vpack.c.b16 %v452, %v452
        %vm458 = vcmask 293888
        %v460 = vsel %vm458, %v427, 0
        %v463 = vsel %vm458, %v428, 0
        %v466 = vsel %vm458, %v429, 0
        %v469 = vsel %vm458, %v430, 0
        %v472 = vsel %vm458, %v431, 0
        %v475 = vsel %vm458, %v432, 0
        %v478 = vsel %vm458, %v433, 0
        %v481 = vsel %vm458, %v434, 0
        %v484 = vsel %vm458, %v435, 0
        %v487 = vsel %vm458, %v436, 0
        %v490 = vsel %vm458, %v437, 0
        %v493 = vsel %vm458, %v438, 0
        %v496 = vsel %vm458, %v439, 0
        %v499 = vsel %vm458, %v440, 0
        %v502 = vsel %vm458, %v441, 0
        %v505 = vsel %vm458, %v442, 0
        %vm507 = vcmask 1041408
        %v509 = vsel %vm507, %v455, 0
        %511 = vmatprep.subr.bf16.mxu0 0
        %512 = vmatpush1.bf16.msra.mxu0 0
        %513 = vmatprep.subr.bf16.mxu0 0
        %514 = vmatpush1.bf16.msra.mxu0 0
        %515 = vmatprep.subr.bf16.mxu0 0
        %516 = vmatpush1.bf16.msra.mxu0 0
        %517 = vmatprep.subr.bf16.mxu0 0
        %518 = vmatpush1.bf16.msra.mxu0 0
        %519 = vmatprep.subr.bf16.mxu0 0
        %520 = vmatpush1.bf16.msra.mxu0 0
        %521 = vmatprep.subr.bf16.mxu0 0
        %522 = vmatpush1.bf16.msra.mxu0 %v509
        %523 = vmatprep.subr.bf16.mxu0 0
        %524 = vmatpush1.bf16.msra.mxu0 %v454
        %525 = vmatprep.subr.bf16.mxu0 0
        %526 = vmatpush1.bf16.msra.mxu0 %v453
        %527 = vmatprep.subr.bf16.mxu0 0
        %528 = vmatpush2.bf16.msra.mxu0 0
        %529 = vmatprep.subr.bf16.mxu0 0
        %530 = vmatpush2.bf16.msra.mxu0 0
        %531 = vmatprep.subr.bf16.mxu0 0
        %532 = vmatpush2.bf16.msra.mxu0 0
        %533 = vmatprep.subr.bf16.mxu0 0
        %534 = vmatpush2.bf16.msra.mxu0 0
        %535 = vmatprep.subr.bf16.mxu0 0
        %536 = vmatpush2.bf16.msra.mxu0 0
        %537 = vmatprep.subr.bf16.mxu0 0
        %538 = vmatpush2.bf16.msra.mxu0 0
        %539 = vmatprep.subr.bf16.mxu0 0
        %540 = vmatpush2.bf16.msra.mxu0 0
        %541 = vmatprep.subr.bf16.mxu0 0
        %542 = vmatpush2.bf16.msra.mxu0 0
        %543 = vmatprep.mubr.bf16.mxu0 0
        %544 = vmatmul.mubr.bf16.gmra.mxu0 %v460
        %v545 = vpop.f32.mrf.mxu0
        %v546 = vadd.f32 %v361, %v545
        %v547 = vpop.f32.mrf.mxu0
        %v548 = vpop.f32.mrf.mxu0
        %v549 = vadd.f32 %v361, %v548
        %v550 = vpop.f32.mrf.mxu0
        %551 = vmatprep.mubr.bf16.mxu0 0
        %552 = vmatmul.mubr.bf16.gmra.mxu0 %v463
        %v553 = vpop.f32.mrf.mxu0
        %v554 = vadd.f32 %v361, %v553
        %v555 = vpop.f32.mrf.mxu0
        %v556 = vpop.f32.mrf.mxu0
        %v557 = vadd.f32 %v361, %v556
        %v558 = vpop.f32.mrf.mxu0
        %559 = vmatprep.mubr.bf16.mxu0 0
        %560 = vmatmul.mubr.bf16.gmra.mxu0 %v466
        %v561 = vpop.f32.mrf.mxu0
        %v562 = vadd.f32 %v361, %v561
        %v563 = vpop.f32.mrf.mxu0
        %v564 = vpop.f32.mrf.mxu0
        %v565 = vadd.f32 %v361, %v564
        %v566 = vpop.f32.mrf.mxu0
        %567 = vmatprep.mubr.bf16.mxu0 0
        %568 = vmatmul.mubr.bf16.gmra.mxu0 %v469
        %v569 = vpop.f32.mrf.mxu0
        %v570 = vadd.f32 %v361, %v569
        %v571 = vpop.f32.mrf.mxu0
        %v572 = vpop.f32.mrf.mxu0
        %v573 = vadd.f32 %v361, %v572
        %v574 = vpop.f32.mrf.mxu0
        %575 = vmatprep.mubr.bf16.mxu0 0
        %576 = vmatmul.mubr.bf16.gmra.mxu0 %v472
        %v577 = vpop.f32.mrf.mxu0
        %v578 = vadd.f32 %v361, %v577
        %v579 = vpop.f32.mrf.mxu0
        %v580 = vpop.f32.mrf.mxu0
        %v581 = vadd.f32 %v361, %v580
        %v582 = vpop.f32.mrf.mxu0
        %583 = vmatprep.mubr.bf16.mxu0 0
        %584 = vmatmul.mubr.bf16.gmra.mxu0 %v475
        %v585 = vpop.f32.mrf.mxu0
        %v586 = vadd.f32 %v361, %v585
        %v587 = vpop.f32.mrf.mxu0
        %v588 = vpop.f32.mrf.mxu0
        %v589 = vadd.f32 %v361, %v588
        %v590 = vpop.f32.mrf.mxu0
        %591 = vmatprep.mubr.bf16.mxu0 0
        %592 = vmatmul.mubr.bf16.gmra.mxu0 %v478
        %v593 = vpop.f32.mrf.mxu0
        %v594 = vadd.f32 %v361, %v593
        %v595 = vpop.f32.mrf.mxu0
        %v596 = vpop.f32.mrf.mxu0
        %v597 = vadd.f32 %v361, %v596
        %v598 = vpop.f32.mrf.mxu0
        %599 = vmatprep.mubr.bf16.mxu0 0
        %600 = vmatmul.mubr.bf16.gmra.mxu0 %v481
        %v601 = vpop.f32.mrf.mxu0
        %v602 = vadd.f32 %v361, %v601
        %v603 = vpop.f32.mrf.mxu0
        %v604 = vpop.f32.mrf.mxu0
        %v605 = vadd.f32 %v361, %v604
        %v606 = vpop.f32.mrf.mxu0
        %607 = vmatprep.mubr.bf16.mxu0 0
        %608 = vmatmul.mubr.bf16.gmra.mxu0 %v484
        %v609 = vpop.f32.mrf.mxu0
        %v610 = vadd.f32 %v361, %v609
        %v611 = vpop.f32.mrf.mxu0
        %v612 = vpop.f32.mrf.mxu0
        %v613 = vadd.f32 %v361, %v612
        %v614 = vpop.f32.mrf.mxu0
        %615 = vmatprep.mubr.bf16.mxu0 0
        %616 = vmatmul.mubr.bf16.gmra.mxu0 %v487
        %v617 = vpop.f32.mrf.mxu0
        %v618 = vadd.f32 %v361, %v617
        %v619 = vpop.f32.mrf.mxu0
        %v620 = vpop.f32.mrf.mxu0
        %v621 = vadd.f32 %v361, %v620
        %v622 = vpop.f32.mrf.mxu0
        %623 = vmatprep.mubr.bf16.mxu0 0
        %624 = vmatmul.mubr.bf16.gmra.mxu0 %v490
        %v625 = vpop.f32.mrf.mxu0
        %v626 = vadd.f32 %v361, %v625
        %v627 = vpop.f32.mrf.mxu0
        %v628 = vpop.f32.mrf.mxu0
        %v629 = vadd.f32 %v361, %v628
        %v630 = vpop.f32.mrf.mxu0
        %631 = vmatprep.mubr.bf16.mxu0 0
        %632 = vmatmul.mubr.bf16.gmra.mxu0 %v493
        %v633 = vpop.f32.mrf.mxu0
        %v634 = vadd.f32 %v361, %v633
        %v635 = vpop.f32.mrf.mxu0
        %v636 = vpop.f32.mrf.mxu0
        %v637 = vadd.f32 %v361, %v636
        %v638 = vpop.f32.mrf.mxu0
        %639 = vmatprep.mubr.bf16.mxu0 0
        %640 = vmatmul.mubr.bf16.gmra.mxu0 %v496
        %v641 = vpop.f32.mrf.mxu0
        %v642 = vadd.f32 %v361, %v641
        %v643 = vpop.f32.mrf.mxu0
        %v644 = vpop.f32.mrf.mxu0
        %v645 = vadd.f32 %v361, %v644
        %v646 = vpop.f32.mrf.mxu0
        %647 = vmatprep.mubr.bf16.mxu0 0
        %648 = vmatmul.mubr.bf16.gmra.mxu0 %v499
        %v649 = vpop.f32.mrf.mxu0
        %v650 = vadd.f32 %v361, %v649
        %v651 = vpop.f32.mrf.mxu0
        %v652 = vpop.f32.mrf.mxu0
        %v653 = vadd.f32 %v361, %v652
        %v654 = vpop.f32.mrf.mxu0
        %655 = vmatprep.mubr.bf16.mxu0 0
        %656 = vmatmul.mubr.bf16.gmra.mxu0 %v502
        %v657 = vpop.f32.mrf.mxu0
        %v658 = vadd.f32 %v361, %v657
        %v659 = vpop.f32.mrf.mxu0
        %v660 = vpop.f32.mrf.mxu0
        %v661 = vadd.f32 %v361, %v660
        %v662 = vpop.f32.mrf.mxu0
        %663 = vmatprep.mubr.bf16.mxu0 0
        %664 = vmatmul.mubr.bf16.gmra.mxu0 %v505
        %v665 = vpop.f32.mrf.mxu0
        %v666 = vadd.f32 %v361, %v665
        %v667 = vpop.f32.mrf.mxu0
        %v668 = vpop.f32.mrf.mxu0
        %v669 = vadd.f32 %v361, %v668
        %v670 = vpop.f32.mrf.mxu0
        %671 = vdwg.mxu0
        %v672 = vmax.f32 %v546, 0.0
        %v673 = vmax.f32 %v549, 0.0
        %v674 = vmax.f32 %v554, 0.0
        %v675 = vmax.f32 %v557, 0.0
        %v676 = vmax.f32 %v562, 0.0
        %v677 = vmax.f32 %v565, 0.0
        %v678 = vmax.f32 %v570, 0.0
        %v679 = vmax.f32 %v573, 0.0
        %v680 = vmax.f32 %v578, 0.0
        %v681 = vmax.f32 %v581, 0.0
        %v682 = vmax.f32 %v586, 0.0
        %v683 = vmax.f32 %v589, 0.0
        %v684 = vmax.f32 %v594, 0.0
        %v685 = vmax.f32 %v597, 0.0
        %v686 = vmax.f32 %v602, 0.0
        %v687 = vmax.f32 %v605, 0.0
        %v688 = vmax.f32 %v610, 0.0
        %v689 = vmax.f32 %v613, 0.0
        %v690 = vmax.f32 %v618, 0.0
        %v691 = vmax.f32 %v621, 0.0
        %v692 = vmax.f32 %v626, 0.0
        %v693 = vmax.f32 %v629, 0.0
        %v694 = vmax.f32 %v634, 0.0
        %v695 = vmax.f32 %v637, 0.0
        %v696 = vmax.f32 %v642, 0.0
        %v697 = vmax.f32 %v645, 0.0
        %v698 = vmax.f32 %v650, 0.0
        %v699 = vmax.f32 %v653, 0.0
        %v700 = vmax.f32 %v658, 0.0
        %v701 = vmax.f32 %v661, 0.0
        %v702 = vmax.f32 %v666, 0.0
        %v703 = vmax.f32 %v669, 0.0
        %v704 = vld [vmem:[#allocation2] sm:$0x1]
        %v705 = vadd.f32 %v672, %v673
        %v706 = vadd.f32 %v705, %v674
        %v707 = vadd.f32 %v706, %v675
        %v708 = vadd.f32 %v707, %v676
        %v709 = vadd.f32 %v708, %v677
        %v710 = vadd.f32 %v709, %v678
        %v711 = vadd.f32 %v710, %v679
        %v712 = vadd.f32 %v711, %v680
        %v713 = vadd.f32 %v712, %v681
        %v714 = vadd.f32 %v713, %v682
        %v715 = vadd.f32 %v714, %v683
        %v716 = vadd.f32 %v715, %v684
        %v717 = vadd.f32 %v716, %v685
        %v718 = vadd.f32 %v717, %v686
        %v719 = vadd.f32 %v718, %v687
        %v720 = vadd.f32 %v719, %v688
        %v721 = vadd.f32 %v720, %v689
        %v722 = vadd.f32 %v721, %v690
        %v723 = vadd.f32 %v722, %v691
        %v724 = vadd.f32 %v723, %v692
        %v725 = vadd.f32 %v724, %v693
        %v726 = vadd.f32 %v725, %v694
        %v727 = vadd.f32 %v726, %v695
        %v728 = vadd.f32 %v727, %v696
        %v729 = vadd.f32 %v728, %v697
        %v730 = vadd.f32 %v729, %v698
        %v731 = vadd.f32 %v730, %v699
        %v732 = vadd.f32 %v731, %v700
        %v733 = vadd.f32 %v732, %v701
        %v734 = vadd.f32 %v733, %v702
        %v735 = vadd.f32 %v734, %v703
        %v736 = vrot.slane %v735, 4
        %v737 = vadd.f32 %v735, %v736
        %v738 = vrot.slane %v737, 2
        %v739 = vadd.f32 %v737, %v738
        %v740 = vrot.slane %v739, 1
        %v741 = vadd.f32 %v739, %v740
        %v742 = vadd.f32 %v704, %v741
        %743 = vst [vmem:[#allocation2] sm:$0x1] %v742
        // Predicated region
        $region49: #{extratcter_map_forward.1} parent=43 // pred_check
          %p744 = pneg %p315
        $region50: #{extratcter_map_forward.1} parent=43 // pred_check_branch
          %746 = sbr.rel (%p744) target = $region52
        $region51: #{extratcter_map_forward.1} parent=43 // pred_region
          %v747 = vld [vmem:[#allocation2] sm:$0x1]
          %v748 = vmul.f32 %v747, 0.00390625
          %749 = vst [vmem:[%s299] sm:$0x1] %v748
          %s750 = scalar_lea.vmem %s5, 1
          %v751 = vld [vmem:[%s750] sm:$0x1]
          %s752 = scalar_lea.vmem %s5, 2
          %v753 = vld [vmem:[%s752] sm:$0x1]
          %s754 = scalar_lea.vmem %s5, 3
          %v755 = vld [vmem:[%s754] sm:$0x1]
          %s756 = scalar_lea.vmem %s5, 4
          %v757 = vld [vmem:[%s756] sm:$0x1]
          %s758 = scalar_lea.vmem %s5, 5
          %v759 = vld [vmem:[%s758] sm:$0x1]
          %s760 = scalar_lea.vmem %s5, 6
          %v761 = vld [vmem:[%s760] sm:$0x1]
          %s762 = scalar_lea.vmem %s5, 7
          %v763 = vld [vmem:[%s762] sm:$0x1]
          %s764 = scalar_lea.vmem %s5, 8
          %v765 = vld [vmem:[%s764] sm:$0x1]
          %s766 = scalar_lea.vmem %s5, 9
          %v767 = vld [vmem:[%s766] sm:$0x1]
          %s768 = scalar_lea.vmem %s5, 10
          %v769 = vld [vmem:[%s768] sm:$0x1]
          %v770 = vpack.c.bf16 %v748, %v748
          %v771 = vld [vmem:[%s2] sm:$0xff]
          %v772 = vld [vmem:[%s2 + $0x8] sm:$0xff]
          %v773 = vld [vmem:[%s2 + $0x10] sm:$0xff]
          %v774 = vld [vmem:[%s2 + $0x18] sm:$0xff]
          %v775 = vld [vmem:[%s2 + $0x20] sm:$0xff]
          %v776 = vld [vmem:[%s2 + $0x28] sm:$0xff]
          %v777 = vld [vmem:[%s2 + $0x30] sm:$0xff]
          %v778 = vld [vmem:[%s2 + $0x38] sm:$0xff]
          %v779 = vld [vmem:[%s2 + $0x40] sm:$0xff]
          %v780 = vld [vmem:[%s2 + $0x48] sm:$0xff]
          %v781 = vld [vmem:[%s2 + $0x50] sm:$0xff]
          %v782 = vld [vmem:[%s2 + $0x58] sm:$0xff]
          %v783 = vld [vmem:[%s2 + $0x60] sm:$0xff]
          %v784 = vld [vmem:[%s2 + $0x68] sm:$0xff]
          %v785 = vld [vmem:[%s2 + $0x70] sm:$0xff]
          %v786 = vld [vmem:[%s2 + $0x78] sm:$0xff]
          %v803 = vunpack.c.l.b16 %v771
          %v804 = vunpack.c.h.b16 %v771
          %v805 = vunpack.c.l.b16 %v772
          %v806 = vunpack.c.h.b16 %v772
          %v807 = vunpack.c.l.b16 %v773
          %v808 = vunpack.c.h.b16 %v773
          %v809 = vunpack.c.l.b16 %v774
          %v810 = vunpack.c.h.b16 %v774
          %v811 = vunpack.c.l.b16 %v775
          %v812 = vunpack.c.h.b16 %v775
          %v813 = vunpack.c.l.b16 %v776
          %v814 = vunpack.c.h.b16 %v776
          %v815 = vunpack.c.l.b16 %v777
          %v816 = vunpack.c.h.b16 %v777
          %v817 = vunpack.c.l.b16 %v778
          %v818 = vunpack.c.h.b16 %v778
          %v819 = vunpack.c.l.b16 %v779
          %v820 = vunpack.c.h.b16 %v779
          %v821 = vunpack.c.l.b16 %v780
          %v822 = vunpack.c.h.b16 %v780
          %v823 = vunpack.c.l.b16 %v781
          %v824 = vunpack.c.h.b16 %v781
          %v825 = vunpack.c.l.b16 %v782
          %v826 = vunpack.c.h.b16 %v782
          %v827 = vunpack.c.l.b16 %v783
          %v828 = vunpack.c.h.b16 %v783
          %v829 = vunpack.c.l.b16 %v784
          %v830 = vunpack.c.h.b16 %v784
          %v831 = vunpack.c.l.b16 %v785
          %v832 = vunpack.c.h.b16 %v785
          %v833 = vunpack.c.l.b16 %v786
          %v834 = vunpack.c.h.b16 %v786
          %v835 = vpack.c.b16 %v805, %v803
          %v836 = vpack.c.b16 %v806, %v804
          %v837 = vpack.c.b16 %v809, %v807
          %v838 = vpack.c.b16 %v810, %v808
          %v839 = vpack.c.b16 %v813, %v811
          %v840 = vpack.c.b16 %v814, %v812
          %v841 = vpack.c.b16 %v817, %v815
          %v842 = vpack.c.b16 %v818, %v816
          %v843 = vpack.c.b16 %v821, %v819
          %v844 = vpack.c.b16 %v822, %v820
          %v845 = vpack.c.b16 %v825, %v823
          %v846 = vpack.c.b16 %v826, %v824
          %v847 = vpack.c.b16 %v829, %v827
          %v848 = vpack.c.b16 %v830, %v828
          %v849 = vpack.c.b16 %v833, %v831
          %v850 = vpack.c.b16 %v834, %v832
          %867 = vmatprep.subr.bf16.mxu0 %v850
          %868 = vmatpush1.bf16.msra.mxu0 %v849
          %869 = vmatprep.subr.bf16.mxu0 %v848
          %870 = vmatpush1.bf16.msra.mxu0 %v847
          %871 = vmatprep.subr.bf16.mxu0 %v846
          %872 = vmatpush1.bf16.msra.mxu0 %v845
          %873 = vmatprep.subr.bf16.mxu0 %v844
          %874 = vmatpush1.bf16.msra.mxu0 %v843
          %875 = vmatprep.subr.bf16.mxu0 %v842
          %876 = vmatpush1.bf16.msra.mxu0 %v841
          %877 = vmatprep.subr.bf16.mxu0 %v840
          %878 = vmatpush1.bf16.msra.mxu0 %v839
          %879 = vmatprep.subr.bf16.mxu0 %v838
          %880 = vmatpush1.bf16.msra.mxu0 %v837
          %881 = vmatprep.subr.bf16.mxu0 %v836
          %882 = vmatpush1.bf16.msra.mxu0 %v835
          %883 = vmatprep.subr.bf16.mxu0 0
          %884 = vmatpush2.bf16.msra.mxu0 0
          %885 = vmatprep.subr.bf16.mxu0 0
          %886 = vmatpush2.bf16.msra.mxu0 0
          %887 = vmatprep.subr.bf16.mxu0 0
          %888 = vmatpush2.bf16.msra.mxu0 0
          %889 = vmatprep.subr.bf16.mxu0 0
          %890 = vmatpush2.bf16.msra.mxu0 0
          %891 = vmatprep.subr.bf16.mxu0 0
          %892 = vmatpush2.bf16.msra.mxu0 0
          %893 = vmatprep.subr.bf16.mxu0 0
          %894 = vmatpush2.bf16.msra.mxu0 0
          %895 = vmatprep.subr.bf16.mxu0 0
          %896 = vmatpush2.bf16.msra.mxu0 0
          %897 = vmatprep.subr.bf16.mxu0 0
          %898 = vmatpush2.bf16.msra.mxu0 0
          %899 = vmatprep.mubr.bf16.mxu0 0
          %900 = vmatmul.mubr.bf16.gmra.mxu0 %v770
          %v901 = vpop.f32.mrf.mxu0
          %v902 = vadd.f32 0.0, %v901
          %v903 = vpop.f32.mrf.mxu0
          %v904 = vadd.f32 0.0, %v903
          %v905 = vpop.f32.mrf.mxu0
          %v906 = vpop.f32.mrf.mxu0
          %907 = vdwg.mxu0
          %v908 = vadd.f32 %v902, %v751
          %v909 = vadd.f32 %v904, %v753
          %v910 = vpack.c.bf16 %v908, %v908
          %v911 = vld [vmem:[%s3] sm:$0xf]
          %v912 = vld [vmem:[%s3 + $0x4] sm:$0xf]
          %v913 = vld [vmem:[%s3 + $0x8] sm:$0xf]
          %v914 = vld [vmem:[%s3 + $0xc] sm:$0xf]
          %v915 = vld [vmem:[%s3 + $0x10] sm:$0xf]
          %v916 = vld [vmem:[%s3 + $0x14] sm:$0xf]
          %v917 = vld [vmem:[%s3 + $0x18] sm:$0xf]
          %v918 = vld [vmem:[%s3 + $0x1c] sm:$0xf]
          %v919 = vld [vmem:[%s3 + $0x20] sm:$0xf]
          %v920 = vld [vmem:[%s3 + $0x24] sm:$0xf]
          %v921 = vld [vmem:[%s3 + $0x28] sm:$0xf]
          %v922 = vld [vmem:[%s3 + $0x2c] sm:$0xf]
          %v923 = vld [vmem:[%s3 + $0x30] sm:$0xf]
          %v924 = vld [vmem:[%s3 + $0x34] sm:$0xf]
          %v925 = vld [vmem:[%s3 + $0x38] sm:$0xf]
          %v926 = vld [vmem:[%s3 + $0x3c] sm:$0xf]
          %v943 = vunpack.c.l.b16 %v911
          %v944 = vunpack.c.l.b16 %v912
          %v945 = vunpack.c.l.b16 %v913
          %v946 = vunpack.c.l.b16 %v914
          %v947 = vunpack.c.l.b16 %v915
          %v948 = vunpack.c.l.b16 %v916
          %v949 = vunpack.c.l.b16 %v917
          %v950 = vunpack.c.l.b16 %v918
          %v951 = vunpack.c.l.b16 %v919
          %v952 = vunpack.c.l.b16 %v920
          %v953 = vunpack.c.l.b16 %v921
          %v954 = vunpack.c.l.b16 %v922
          %v955 = vunpack.c.l.b16 %v923
          %v956 = vunpack.c.l.b16 %v924
          %v957 = vunpack.c.l.b16 %v925
          %v958 = vunpack.c.l.b16 %v926
          %v959 = vpack.c.b16 %v944, %v943
          %v960 = vpack.c.b16 %v946, %v945
          %v961 = vpack.c.b16 %v948, %v947
          %v962 = vpack.c.b16 %v950, %v949
          %v963 = vpack.c.b16 %v952, %v951
          %v964 = vpack.c.b16 %v954, %v953
          %v965 = vpack.c.b16 %v956, %v955
          %v966 = vpack.c.b16 %v958, %v957
          %975 = vmatprep.subr.bf16.mxu0 0
          %976 = vmatpush1.bf16.msra.mxu0 %v966
          %977 = vmatprep.subr.bf16.mxu0 0
          %978 = vmatpush1.bf16.msra.mxu0 %v965
          %979 = vmatprep.subr.bf16.mxu0 0
          %980 = vmatpush1.bf16.msra.mxu0 %v964
          %981 = vmatprep.subr.bf16.mxu0 0
          %982 = vmatpush1.bf16.msra.mxu0 %v963
          %983 = vmatprep.subr.bf16.mxu0 0
          %984 = vmatpush1.bf16.msra.mxu0 %v962
          %985 = vmatprep.subr.bf16.mxu0 0
          %986 = vmatpush1.bf16.msra.mxu0 %v961
          %987 = vmatprep.subr.bf16.mxu0 0
          %988 = vmatpush1.bf16.msra.mxu0 %v960
          %989 = vmatprep.subr.bf16.mxu0 0
          %990 = vmatpush1.bf16.msra.mxu0 %v959
          %991 = vmatprep.subr.bf16.mxu0 0
          %992 = vmatpush2.bf16.msra.mxu0 0
          %993 = vmatprep.subr.bf16.mxu0 0
          %994 = vmatpush2.bf16.msra.mxu0 0
          %995 = vmatprep.subr.bf16.mxu0 0
          %996 = vmatpush2.bf16.msra.mxu0 0
          %997 = vmatprep.subr.bf16.mxu0 0
          %998 = vmatpush2.bf16.msra.mxu0 0
          %999 = vmatprep.subr.bf16.mxu0 0
          %1000 = vmatpush2.bf16.msra.mxu0 0
          %1001 = vmatprep.subr.bf16.mxu0 0
          %1002 = vmatpush2.bf16.msra.mxu0 0
          %1003 = vmatprep.subr.bf16.mxu0 0
          %1004 = vmatpush2.bf16.msra.mxu0 0
          %1005 = vmatprep.subr.bf16.mxu0 0
          %1006 = vmatpush2.bf16.msra.mxu0 0
          %1007 = vmatprep.mubr.bf16.mxu0 0
          %1008 = vmatmul.mubr.bf16.gmra.mxu0 %v910
          %v1009 = vpop.f32.mrf.mxu0
          %v1010 = vadd.f32 %v755, %v1009
          %v1011 = vpop.f32.mrf.mxu0
          %v1012 = vpop.f32.mrf.mxu0
          %v1013 = vpop.f32.mrf.mxu0
          %1014 = vdwg.mxu0
          %v1015 = vxor.u32 %v1010, 2147483648
          %v1016 = vmul.f32 %v1015, 1.442695
          %v1017 = vpow.pop %v1016
          %v1018 = vadd.f32 %v1017, 1.0
          %v1019 = vrcp.pop %v1018
          %v1020 = vmul.f32 1.0, %v1019
          %v1021 = vmul.f32 %v909, %v1020
          %v1022 = vpack.c.bf16 %v909, %v909
          %v1023 = vpack.c.bf16 %v1021, %v1021
          %v1024 = vld [vmem:[%s4] sm:$0xf]
          %v1025 = vld [vmem:[%s4 + $0x4] sm:$0xf]
          %v1026 = vld [vmem:[%s4 + $0x8] sm:$0xf]
          %v1027 = vld [vmem:[%s4 + $0xc] sm:$0xf]
          %v1028 = vld [vmem:[%s4 + $0x10] sm:$0xf]
          %v1029 = vld [vmem:[%s4 + $0x14] sm:$0xf]
          %v1030 = vld [vmem:[%s4 + $0x18] sm:$0xf]
          %v1031 = vld [vmem:[%s4 + $0x1c] sm:$0xf]
          %v1032 = vld [vmem:[%s4 + $0x20] sm:$0xf]
          %v1033 = vld [vmem:[%s4 + $0x24] sm:$0xf]
          %v1034 = vld [vmem:[%s4 + $0x28] sm:$0xf]
          %v1035 = vld [vmem:[%s4 + $0x2c] sm:$0xf]
          %v1036 = vld [vmem:[%s4 + $0x30] sm:$0xf]
          %v1037 = vld [vmem:[%s4 + $0x34] sm:$0xf]
          %v1038 = vld [vmem:[%s4 + $0x38] sm:$0xf]
          %v1039 = vld [vmem:[%s4 + $0x3c] sm:$0xf]
          %v1040 = vld [vmem:[%s4 + $0x40] sm:$0xf]
          %v1041 = vld [vmem:[%s4 + $0x44] sm:$0xf]
          %v1042 = vld [vmem:[%s4 + $0x48] sm:$0xf]
          %v1043 = vld [vmem:[%s4 + $0x4c] sm:$0xf]
          %v1044 = vld [vmem:[%s4 + $0x50] sm:$0xf]
          %v1045 = vld [vmem:[%s4 + $0x54] sm:$0xf]
          %v1046 = vld [vmem:[%s4 + $0x58] sm:$0xf]
          %v1047 = vld [vmem:[%s4 + $0x5c] sm:$0xf]
          %v1048 = vld [vmem:[%s4 + $0x60] sm:$0xf]
          %v1049 = vld [vmem:[%s4 + $0x64] sm:$0xf]
          %v1050 = vld [vmem:[%s4 + $0x68] sm:$0xf]
          %v1051 = vld [vmem:[%s4 + $0x6c] sm:$0xf]
          %v1052 = vld [vmem:[%s4 + $0x70] sm:$0xf]
          %v1053 = vld [vmem:[%s4 + $0x74] sm:$0xf]
          %v1054 = vld [vmem:[%s4 + $0x78] sm:$0xf]
          %v1055 = vld [vmem:[%s4 + $0x7c] sm:$0xf]
          %v1056 = vld [vmem:[%s4 + $0x80] sm:$0xf]
          %v1057 = vld [vmem:[%s4 + $0x84] sm:$0xf]
          %v1058 = vld [vmem:[%s4 + $0x88] sm:$0xf]
          %v1059 = vld [vmem:[%s4 + $0x8c] sm:$0xf]
          %v1060 = vld [vmem:[%s4 + $0x90] sm:$0xf]
          %v1061 = vld [vmem:[%s4 + $0x94] sm:$0xf]
          %v1062 = vld [vmem:[%s4 + $0x98] sm:$0xf]
          %v1063 = vld [vmem:[%s4 + $0x9c] sm:$0xf]
          %v1064 = vld [vmem:[%s4 + $0xa0] sm:$0xf]
          %v1065 = vld [vmem:[%s4 + $0xa4] sm:$0xf]
          %v1066 = vld [vmem:[%s4 + $0xa8] sm:$0xf]
          %v1067 = vld [vmem:[%s4 + $0xac] sm:$0xf]
          %v1068 = vld [vmem:[%s4 + $0xb0] sm:$0xf]
          %v1069 = vld [vmem:[%s4 + $0xb4] sm:$0xf]
          %v1070 = vld [vmem:[%s4 + $0xb8] sm:$0xf]
          %v1071 = vld [vmem:[%s4 + $0xbc] sm:$0xf]
          %v1120 = vunpack.c.l.b16 %v1024
          %v1121 = vunpack.c.l.b16 %v1025
          %v1122 = vunpack.c.l.b16 %v1026
          %v1123 = vunpack.c.l.b16 %v1027
          %v1124 = vunpack.c.l.b16 %v1028
          %v1125 = vunpack.c.l.b16 %v1029
          %v1126 = vunpack.c.l.b16 %v1030
          %v1127 = vunpack.c.l.b16 %v1031
          %v1128 = vunpack.c.l.b16 %v1032
          %v1129 = vunpack.c.l.b16 %v1033
          %v1130 = vunpack.c.l.b16 %v1034
          %v1131 = vunpack.c.l.b16 %v1035
          %v1132 = vunpack.c.l.b16 %v1036
          %v1133 = vunpack.c.l.b16 %v1037
          %v1134 = vunpack.c.l.b16 %v1038
          %v1135 = vunpack.c.l.b16 %v1039
          %v1136 = vunpack.c.l.b16 %v1040
          %v1137 = vunpack.c.l.b16 %v1041
          %v1138 = vunpack.c.l.b16 %v1042
          %v1139 = vunpack.c.l.b16 %v1043
          %v1140 = vunpack.c.l.b16 %v1044
          %v1141 = vunpack.c.l.b16 %v1045
          %v1142 = vunpack.c.l.b16 %v1046
          %v1143 = vunpack.c.l.b16 %v1047
          %v1144 = vunpack.c.l.b16 %v1048
          %v1145 = vunpack.c.l.b16 %v1049
          %v1146 = vunpack.c.l.b16 %v1050
          %v1147 = vunpack.c.l.b16 %v1051
          %v1148 = vunpack.c.l.b16 %v1052
          %v1149 = vunpack.c.l.b16 %v1053
          %v1150 = vunpack.c.l.b16 %v1054
          %v1151 = vunpack.c.l.b16 %v1055
          %v1152 = vunpack.c.l.b16 %v1056
          %v1153 = vunpack.c.l.b16 %v1057
          %v1154 = vunpack.c.l.b16 %v1058
          %v1155 = vunpack.c.l.b16 %v1059
          %v1156 = vunpack.c.l.b16 %v1060
          %v1157 = vunpack.c.l.b16 %v1061
          %v1158 = vunpack.c.l.b16 %v1062
          %v1159 = vunpack.c.l.b16 %v1063
          %v1160 = vunpack.c.l.b16 %v1064
          %v1161 = vunpack.c.l.b16 %v1065
          %v1162 = vunpack.c.l.b16 %v1066
          %v1163 = vunpack.c.l.b16 %v1067
          %v1164 = vunpack.c.l.b16 %v1068
          %v1165 = vunpack.c.l.b16 %v1069
          %v1166 = vunpack.c.l.b16 %v1070
          %v1167 = vunpack.c.l.b16 %v1071
          %v1168 = vpack.c.b16 %v1121, %v1120
          %v1169 = vpack.c.b16 %v1123, %v1122
          %v1170 = vpack.c.b16 %v1125, %v1124
          %v1171 = vpack.c.b16 %v1127, %v1126
          %v1172 = vpack.c.b16 %v1129, %v1128
          %v1173 = vpack.c.b16 %v1131, %v1130
          %v1174 = vpack.c.b16 %v1133, %v1132
          %v1175 = vpack.c.b16 %v1135, %v1134
          %v1176 = vpack.c.b16 %v1137, %v1136
          %v1177 = vpack.c.b16 %v1139, %v1138
          %v1178 = vpack.c.b16 %v1141, %v1140
          %v1179 = vpack.c.b16 %v1143, %v1142
          %v1180 = vpack.c.b16 %v1145, %v1144
          %v1181 = vpack.c.b16 %v1147, %v1146
          %v1182 = vpack.c.b16 %v1149, %v1148
          %v1183 = vpack.c.b16 %v1151, %v1150
          %v1184 = vpack.c.b16 %v1153, %v1152
          %v1185 = vpack.c.b16 %v1155, %v1154
          %v1186 = vpack.c.b16 %v1157, %v1156
          %v1187 = vpack.c.b16 %v1159, %v1158
          %v1188 = vpack.c.b16 %v1161, %v1160
          %v1189 = vpack.c.b16 %v1163, %v1162
          %v1190 = vpack.c.b16 %v1165, %v1164
          %v1191 = vpack.c.b16 %v1167, %v1166
          %1216 = vmatprep.subr.bf16.mxu0 0
          %1217 = vmatpush1.bf16.msra.mxu0 %v1175
          %1218 = vmatprep.subr.bf16.mxu0 0
          %1219 = vmatpush1.bf16.msra.mxu0 %v1174
          %1220 = vmatprep.subr.bf16.mxu0 0
          %1221 = vmatpush1.bf16.msra.mxu0 %v1173
          %1222 = vmatprep.subr.bf16.mxu0 0
          %1223 = vmatpush1.bf16.msra.mxu0 %v1172
          %1224 = vmatprep.subr.bf16.mxu0 0
          %1225 = vmatpush1.bf16.msra.mxu0 %v1171
          %1226 = vmatprep.subr.bf16.mxu0 0
          %1227 = vmatpush1.bf16.msra.mxu0 %v1170
          %1228 = vmatprep.subr.bf16.mxu0 0
          %1229 = vmatpush1.bf16.msra.mxu0 %v1169
          %1230 = vmatprep.subr.bf16.mxu0 0
          %1231 = vmatpush1.bf16.msra.mxu0 %v1168
          %1232 = vmatprep.subr.bf16.mxu0 0
          %1233 = vmatpush2.bf16.msra.mxu0 %v1183
          %1234 = vmatprep.subr.bf16.mxu0 0
          %1235 = vmatpush2.bf16.msra.mxu0 %v1182
          %1236 = vmatprep.subr.bf16.mxu0 0
          %1237 = vmatpush2.bf16.msra.mxu0 %v1181
          %1238 = vmatprep.subr.bf16.mxu0 0
          %1239 = vmatpush2.bf16.msra.mxu0 %v1180
          %1240 = vmatprep.subr.bf16.mxu0 0
          %1241 = vmatpush2.bf16.msra.mxu0 %v1179
          %1242 = vmatprep.subr.bf16.mxu0 0
          %1243 = vmatpush2.bf16.msra.mxu0 %v1178
          %1244 = vmatprep.subr.bf16.mxu0 0
          %1245 = vmatpush2.bf16.msra.mxu0 %v1177
          %1246 = vmatprep.subr.bf16.mxu0 0
          %1247 = vmatpush2.bf16.msra.mxu0 %v1176
          %1248 = vmatprep.mubr.bf16.mxu0 %v1022
          %1249 = vmatmul.mubr.bf16.gmra.mxu0 %v910
          %v1250 = vpop.f32.mrf.mxu0
          %v1251 = vadd.f32 %v757, %v1250
          %v1252 = vpop.f32.mrf.mxu0
          %v1253 = vpop.f32.mrf.mxu0
          %v1254 = vpop.f32.mrf.mxu0
          %1255 = vdwg.mxu0
          %1256 = vmatprep.subr.bf16.mxu0 0
          %1257 = vmatpush1.bf16.msra.mxu0 %v1191
          %1258 = vmatprep.subr.bf16.mxu0 0
          %1259 = vmatpush1.bf16.msra.mxu0 %v1190
          %1260 = vmatprep.subr.bf16.mxu0 0
          %1261 = vmatpush1.bf16.msra.mxu0 %v1189
          %1262 = vmatprep.subr.bf16.mxu0 0
          %1263 = vmatpush1.bf16.msra.mxu0 %v1188
          %1264 = vmatprep.subr.bf16.mxu0 0
          %1265 = vmatpush1.bf16.msra.mxu0 %v1187
          %1266 = vmatprep.subr.bf16.mxu0 0
          %1267 = vmatpush1.bf16.msra.mxu0 %v1186
          %1268 = vmatprep.subr.bf16.mxu0 0
          %1269 = vmatpush1.bf16.msra.mxu0 %v1185
          %1270 = vmatprep.subr.bf16.mxu0 0
          %1271 = vmatpush1.bf16.msra.mxu0 %v1184
          %1272 = vmatprep.subr.bf16.mxu0 0
          %1273 = vmatpush2.bf16.msra.mxu0 0
          %1274 = vmatprep.subr.bf16.mxu0 0
          %1275 = vmatpush2.bf16.msra.mxu0 0
          %1276 = vmatprep.subr.bf16.mxu0 0
          %1277 = vmatpush2.bf16.msra.mxu0 0
          %1278 = vmatprep.subr.bf16.mxu0 0
          %1279 = vmatpush2.bf16.msra.mxu0 0
          %1280 = vmatprep.subr.bf16.mxu0 0
          %1281 = vmatpush2.bf16.msra.mxu0 0
          %1282 = vmatprep.subr.bf16.mxu0 0
          %1283 = vmatpush2.bf16.msra.mxu0 0
          %1284 = vmatprep.subr.bf16.mxu0 0
          %1285 = vmatpush2.bf16.msra.mxu0 0
          %1286 = vmatprep.subr.bf16.mxu0 0
          %1287 = vmatpush2.bf16.msra.mxu0 0
          %1288 = vmatprep.mubr.bf16.mxu0 0
          %1289 = vmatmul.mubr.bf16.gmra.mxu0 %v1023
          %v1290 = vpop.f32.mrf.mxu0
          %v1291 = vadd.f32 %v1251, %v1290
          %v1292 = vpop.f32.mrf.mxu0
          %v1293 = vpop.f32.mrf.mxu0
          %v1294 = vpop.f32.mrf.mxu0
          %1295 = vdwg.mxu0
          %v1296 = vmul.f32 %v1291, %v759
          %v1297 = vadd.f32 %v1296, %v761
          %v1298 = vmax.f32 %v1297, 0.0
          %v1299 = vmin.f32 %v1297, 0.0
          %v1300 = vmul.f32 %v763, %v1299
          %v1301 = vadd.f32 %v1298, %v1300
          %v1302 = vmul.f32 %v1301, %v765
          %v1303 = vadd.f32 %v1302, %v767
          %vm1304 = vcmask 1040384
          %v1305 = vsel %vm1304, %v1303, 0.0
          %1306 = vadd.xlane.f32.xlu0 %v1305
          %v1307 = vpop.xlane.xlu0 %1306
          %v1308 = vmax.f32 %v1307, 0.0
          %v1309 = vmin.f32 %v1307, 0.0
          %v1310 = vmul.f32 %v769, %v1309
          %v1311 = vadd.f32 %v1308, %v1310
          %1312 = vst [vmem:[%s312] sm:$0x1] %v1311
        $region52: #{extratcter_map_forward.1} parent=43 // pred_fallthru
          _
        %p1313 = scmp.lt.s32.totalorder %s26, 1
        %s1314 = scalar_select %p1313, %s26, 1
        %s1315 = scalar_lea.vmem %s6, %s1314
        %s1316 = sand.u32 %s201, 1
        %s1317 = scalar_lea.sflag [#allocation4], %s1316
        %s1318 = sand.u32 %s201, 1
        %s1319 = scalar_lea.vmem [#allocation3], %s1318
        // Predicated region
        $region53: #{extratcter_map_forward.1} parent=43 // pred_check
          %p1320 = pneg %p185
        $region54: #{extratcter_map_forward.1} parent=43 // pred_check_branch
          %1322 = sbr.rel (%p1320) target = $region56
        $region55: #{extratcter_map_forward.1} parent=43 // pred_region
          _
        $region56: #{extratcter_map_forward.1} parent=43 // pred_fallthru
          _
        // Predicated region
        $region57: #{extratcter_map_forward.1} parent=43 // pred_check
          %p1323 = pneg %p211
        $region58: #{extratcter_map_forward.1} parent=43 // pred_check_branch
          %1325 = sbr.rel (%p1323) target = $region60
        $region59: #{extratcter_map_forward.1} parent=43 // pred_region
          %s1327 = ssub.s32 16, 16
          %1328 = vsyncadd %s1317, %s1327
          %s1329 = smul.addr %s26, 16
          %s1330 = scalar_lea.hbm %s7, %s1329
          %s1332 = sshll.u32 %s1319, 4
          %s1333 = int_to_ptr.vmem [resolvable:$true] %s1332
          %1335 = dma.vmem_to_hbm [thread:$0]  %s1333, 16, %s1330, %s1317
        $region60: #{extratcter_map_forward.1} parent=43 // pred_fallthru
          _
      $region44: #{extratcter_map_forward.1} parent=5 // pred_fallthru
        _
      %p1336 = scmp.le.s32.totalorder 2, %s17
      // Predicated region
      $region61: #{extratcter_map_forward.1} parent=5 // pred_check
        %p1337 = pneg %p1336
      $region62: #{extratcter_map_forward.1} parent=5 // pred_check_branch
        %1339 = sbr.rel (%p1337) target = $region64
      $region63: #{extratcter_map_forward.1} parent=5 // pred_region
        %s1340 = ssub.s32 %s17, 2
        // Predicated region
        $region65: #{extratcter_map_forward.1} parent=63 // pred_check
          %p1341 = pneg %p191
        $region66: #{extratcter_map_forward.1} parent=63 // pred_check_branch
          %1343 = sbr.rel (%p1341) target = $region68
        $region67: #{extratcter_map_forward.1} parent=63 // pred_region
          %p1344 = scmp.lt.s32.totalorder %s28, 1
          %s1345 = scalar_select %p1344, %s28, 1
          %s1346 = scalar_lea.vmem %s6, %s1345
        $region68: #{extratcter_map_forward.1} parent=63 // pred_fallthru
          _
        // Predicated region
        $region69: #{extratcter_map_forward.1} parent=63 // pred_check
          %p1347 = pneg %p217
        $region70: #{extratcter_map_forward.1} parent=63 // pred_check_branch
          %1349 = sbr.rel (%p1347) target = $region72
        $region71: #{extratcter_map_forward.1} parent=63 // pred_region
          %s1350 = sand.u32 %s202, 1
          %s1351 = scalar_lea.sflag [#allocation4], %s1350
          %s1352 = sand.u32 %s202, 1
          %s1353 = scalar_lea.vmem [#allocation3], %s1352
          %1354 = dma.done %s1351, 16
        $region72: #{extratcter_map_forward.1} parent=63 // pred_fallthru
          _
      $region64: #{extratcter_map_forward.1} parent=5 // pred_fallthru
        _
    $region6: #{extratcter_map_forward.1} parent=1 // loop_footer
      %s21 = sadd.s32 1, %s17
    $region7: #{extratcter_map_forward.1} parent=1 // loop_footer_branch
      %16 = sbr.rel target = $region3
    $region8: #{extratcter_map_forward.1} parent=1 // loop_exit
      _
    %1355 = vsyncpa [#allocation4], 1
    %s1356 = scalar_lea.sflag [#allocation4], 1
    %1357 = vsyncpa %s1356, 1

</llo_original>
